<compile_context>
chip_gen: v6e
topology: v6e:2x2x1
jax: 0.10.0
libtpu: 0.0.40
codegen_flags: <defaults>
</compile_context>

<pallas_src>
import functools

import jax
import jax.numpy as jnp
from jax import lax
from jax.experimental import pallas as pl
from jax.experimental.pallas import tpu as pltpu


def _fused_attention_kernel(x_ref, wqkv_ref, wout_ref, bias_ref, o_ref,
                            qkv_scr, out_scr, *, heads, dim_head):
    """grid = (batch, head); batch is "parallel", head is "arbitrary".

    x_ref:    (1, C, N)        NCHW input, spatially flattened (pure reshape)
    wqkv_ref: (3*hidden, C)    conv1x1 QKV weight; Q rows pre-scaled by dh^-0.5
    wout_ref: (C, hidden)      conv1x1 output-projection weight
    bias_ref: (C, 1)           output-projection bias
    o_ref:    (1, C, N)        output (lane-dense N store)
    qkv_scr:  (3*hidden, N)    VMEM scratch: QKV for ALL heads of this batch
    out_scr:  (hidden, N)      VMEM scratch: per-head normalized PV (out_T)
    """
    hidden = heads * dim_head
    hi = pl.program_id(1)

    @pl.when(hi == 0)
    def _():
        # One lane-dense matmul produces q, k, v for ALL heads of this batch.
        qkv_scr[...] = jnp.dot(wqkv_ref[...], x_ref[0],
                               preferred_element_type=jnp.float32)   # (3H, N)

    q_off = pl.multiple_of(hi * dim_head, dim_head)
    k_off = pl.multiple_of(hidden + hi * dim_head, dim_head)
    v_off = pl.multiple_of(2 * hidden + hi * dim_head, dim_head)
    q = qkv_scr[pl.ds(q_off, dim_head), :]           # (dh, N)  Q pre-scaled
    k = qkv_scr[pl.ds(k_off, dim_head), :]           # (dh, N)
    v = qkv_scr[pl.ds(v_off, dim_head), :]           # (dh, N)

    # sim_T[j, i] = sum_d k[d, j] * q[d, i]  (scores transposed: the softmax
    # reductions over j land lane-major as (1, N_i), matching pv's layout).
    sim_t = lax.dot_general(k, q, (((0,), (0,)), ((), ())),
                            preferred_element_type=jnp.float32)      # (Nj, Ni)
    e = jnp.exp(sim_t - jnp.max(sim_t, axis=0, keepdims=True))       # (Nj, Ni)
    denom = jnp.sum(e, axis=0, keepdims=True)                        # (1, Ni)

    # Unnormalized PV first, then normalize AFTER the matmul: the reciprocal
    # touches (dh, N) instead of the (N, N) score matrix.
    pv = jnp.dot(v, e, preferred_element_type=jnp.float32)           # (dh, Ni)
    out_scr[pl.ds(q_off, dim_head), :] = pv * pl.reciprocal(denom, approx=True)

    @pl.when(hi == heads - 1)
    def _():
        # Single K=hidden output projection for all heads; lane-dense store.
        y = jnp.dot(wout_ref[...], out_scr[...],
                    preferred_element_type=jnp.float32)              # (C, N)
        o_ref[0] = (y + bias_ref[...]).astype(o_ref.dtype)


def attention_pallas(x_nchw, params, *, heads, dim_head):
    """x_nchw: (B, C, H, W) float32. Returns (B, C, H, W)."""
    b, c, h, w = x_nchw.shape
    n = h * w
    hidden = heads * dim_head
    scale = dim_head ** (-0.5)

    wqkv = params["w_qkv"]          # (3*hidden, C)   conv1x1 weight, no bias
    wout = params["w_out"]          # (C, hidden)     conv1x1 weight
    bout = params["b_out"]          # (C,)

    # --- static weight prep (done once by XLA, outside the kernel) ---
    # Fold the softmax scale into the Q rows of Wqkv.
    row_scale = jnp.concatenate(
        [jnp.full((hidden,), scale, dtype=jnp.float32),
         jnp.ones((2 * hidden,), dtype=jnp.float32)])
    wqkv_scaled = (wqkv * row_scale[:, None]).astype(jnp.float32)    # (3H, C)
    bias = bout.reshape(c, 1).astype(jnp.float32)

    # NCHW -> (B, C, N): a pure reshape, no HBM transpose round-trip.
    x_flat = x_nchw.reshape(b, c, n)

    kernel = functools.partial(_fused_attention_kernel,
                               heads=heads, dim_head=dim_head)

    # TODO(synk): for large N (>~1k on v7x / v5e-default-VMEM, >~2.5k on v6e)
    # switch to a flash-style KV-tiled online softmax (KV grid axis marked
    # "arbitrary" + m/l/acc scratch) to keep VMEM O(N*tile) instead of the
    # monolithic (N, N) score block.
    # TODO(synk): if B can be 1 on v7x (2 TensorCores), add a second parallel
    # grid axis over query row-tiles so both cores get work.
    y_cn = pl.pallas_call(
        kernel,
        out_shape=jax.ShapeDtypeStruct((b, c, n), jnp.float32),
        grid_spec=pltpu.PrefetchScalarGridSpec(
            num_scalar_prefetch=0,
            grid=(b, heads),
            in_specs=[
                pl.BlockSpec((1, c, n), lambda bi, hi: (bi, 0, 0)),
                pl.BlockSpec((3 * hidden, c), lambda bi, hi: (0, 0)),
                pl.BlockSpec((c, hidden), lambda bi, hi: (0, 0)),
                pl.BlockSpec((c, 1), lambda bi, hi: (0, 0)),
            ],
            out_specs=pl.BlockSpec((1, c, n), lambda bi, hi: (bi, 0, 0)),
            scratch_shapes=[
                pltpu.VMEM((3 * hidden, n), jnp.float32),   # qkv (all heads)
                pltpu.VMEM((hidden, n), jnp.float32),       # out_T
            ],
        ),
        compiler_params=pltpu.CompilerParams(
            dimension_semantics=("parallel", "arbitrary"),
            # Explicit scoped-VMEM limit (v5e default is only 16 MiB); 32 MiB
            # is safe on v5e/v6e/v7x and ample for these shapes.
            vmem_limit_bytes=32 * 1024 * 1024),
    )(x_flat, wqkv_scaled, wout, bias)

    # (B, C, N) -> NCHW by reshape only (no final transpose needed).
    return y_cn.reshape(b, c, h, w)


def _reference(x_nchw, params, *, heads, dim_head):
    """Pure-JAX reference mirroring the PyTorch forward."""
    b, c, h, w = x_nchw.shape
    n = h * w
    hidden = heads * dim_head
    scale = dim_head ** (-0.5)
    wqkv, wout, bout = params["w_qkv"], params["w_out"], params["b_out"]

    x_flat = x_nchw.reshape(b, c, n)                        # (B, C, N)
    qkv = jnp.einsum("oc,bcn->bon", wqkv, x_flat)           # (B, 3*hidden, N)
    q, k, v = jnp.split(qkv, 3, axis=1)
    reh = lambda t: t.reshape(b, heads, dim_head, n)        # b h d (xy)
    q, k, v = reh(q) * scale, reh(k), reh(v)
    sim = jnp.einsum("bhdi,bhdj->bhij", q, k)
    sim = sim - jnp.max(sim, axis=-1, keepdims=True)
    attn = jax.nn.softmax(sim, axis=-1)
    out = jnp.einsum("bhij,bhdj->bhid", attn, v)            # (B, h, N, d)
    out = jnp.transpose(out, (0, 1, 3, 2)).reshape(b, hidden, h, w)
    y = jnp.einsum("oc,bchw->bohw", wout, out) + bout[None, :, None, None]
    return y


if __name__ == "__main__":
    # Small, deterministic setup (module defaults: heads=4, dim_head=32).
    B, DIM, H, W = 2, 4, 16, 16
    HEADS, DIM_HEAD = 4, 32
    HIDDEN = HEADS * DIM_HEAD

    key = jax.random.PRNGKey(0)
    kx, kq, ko, kb = jax.random.split(key, 4)

    x = jax.random.normal(kx, (B, DIM, H, W), dtype=jnp.float32)
    params = {
        "w_qkv": jax.random.normal(kq, (3 * HIDDEN, DIM), dtype=jnp.float32) * 0.05,
        "w_out": jax.random.normal(ko, (DIM, HIDDEN), dtype=jnp.float32) * 0.05,
        "b_out": jax.random.normal(kb, (DIM,), dtype=jnp.float32) * 0.05,
    }

    y = attention_pallas(x, params, heads=HEADS, dim_head=DIM_HEAD)
    y = jax.block_until_ready(y)

    y_ref = _reference(x, params, heads=HEADS, dim_head=DIM_HEAD)
    assert y.shape == (B, DIM, H, W)
    # approx=True softmax reciprocal -> slightly looser tolerance than exact f32.
    assert jnp.allclose(y, y_ref, atol=2e-3, rtol=2e-3), "mismatch vs reference"

    print("KERNEL_OK")
</pallas_src>

<mosaic_0001>
module attributes {stable_mosaic.version = 11 : i64} {
  func.func @_fused_attention_kernel(%arg0: i32, %arg1: i32, %arg2: memref<1x4x256xf32, #tpu.memory_space<vmem>>, %arg3: memref<384x4xf32, #tpu.memory_space<vmem>>, %arg4: memref<4x128xf32, #tpu.memory_space<vmem>>, %arg5: memref<4x1xf32, #tpu.memory_space<vmem>>, %arg6: memref<1x4x256xf32, #tpu.memory_space<vmem>>, %arg7: memref<384x256xf32, #tpu.memory_space<vmem>>, %arg8: memref<128x256xf32, #tpu.memory_space<vmem>>) attributes {dimension_semantics = [#tpu.dimension_semantics<parallel>, #tpu.dimension_semantics<arbitrary>], iteration_bounds = array<i64: 2, 4>, scalar_prefetch = 0 : i64, scratch_operands = 2 : i64, tpu.core_type = #tpu.core_type<tc>, window_params = [{transform_indices = @transform_0, window_bounds = array<i64: 1, 4, 256>}, {pipeline_mode = #tpu.pipeline_mode<synchronous>, transform_indices = @transform_1, window_bounds = array<i64: 384, 4>}, {pipeline_mode = #tpu.pipeline_mode<synchronous>, transform_indices = @transform_2, window_bounds = array<i64: 4, 128>}, {pipeline_mode = #tpu.pipeline_mode<synchronous>, transform_indices = @transform_3, window_bounds = array<i64: 4, 1>}, {transform_indices = @transform_4, window_bounds = array<i64: 1, 4, 256>}]} {
    %c0_i32 = arith.constant 0 : i32
    %0 = arith.cmpi eq, %arg1, %c0_i32 : i32
    %1 = arith.extui %0 : i1 to i32
    %c0_i32_0 = arith.constant 0 : i32
    %2 = arith.cmpi ne, %1, %c0_i32_0 : i32
    scf.if %2 {
      %c0_10 = arith.constant 0 : index
      %c0_11 = arith.constant 0 : index
      %34 = vector.load %arg3[%c0_10, %c0_11] : memref<384x4xf32, #tpu.memory_space<vmem>>, vector<384x4xf32>
      %c0_12 = arith.constant 0 : index
      %c0_13 = arith.constant 0 : index
      %c0_14 = arith.constant 0 : index
      %35 = vector.load %arg2[%c0_12, %c0_13, %c0_14] : memref<1x4x256xf32, #tpu.memory_space<vmem>>, vector<1x4x256xf32>
      %36 = vector.shape_cast %35 : vector<1x4x256xf32> to vector<4x256xf32>
      %cst_15 = arith.constant dense<0.000000e+00> : vector<384x256xf32>
      %37 = tpu.matmul %34, %36, %cst_15 {dimension_numbers = #tpu.dot_dimension_numbers<[1], [0], [0], [1], [0, 0, 1, 1], [], []>} : vector<384x4xf32>, vector<4x256xf32>, vector<384x256xf32> -> vector<384x256xf32>
      %c0_16 = arith.constant 0 : index
      %c0_17 = arith.constant 0 : index
      %38 = vector.load %arg7[%c0_16, %c0_17] : memref<384x256xf32, #tpu.memory_space<vmem>>, vector<384x256xf32>
      tpu.vector_store %arg7[%c0_16, %c0_17], %37 {strides = array<i32>} : memref<384x256xf32, #tpu.memory_space<vmem>>, vector<384x256xf32>,
    } else {
    }
    %c32_i32 = arith.constant 32 : i32
    %3 = arith.muli %arg1, %c32_i32 : i32
    %4 = tpu.assume_multiple %3, 32 : i32
    %c32_i32_1 = arith.constant 32 : i32
    %5 = arith.muli %arg1, %c32_i32_1 : i32
    %c128_i32 = arith.constant 128 : i32
    %6 = arith.addi %c128_i32, %5 : i32
    %7 = tpu.assume_multiple %6, 32 : i32
    %c32_i32_2 = arith.constant 32 : i32
    %8 = arith.muli %arg1, %c32_i32_2 : i32
    %c256_i32 = arith.constant 256 : i32
    %9 = arith.addi %c256_i32, %8 : i32
    %10 = tpu.assume_multiple %9, 32 : i32
    %11 = arith.index_cast %4 : i32 to index
    %c0 = arith.constant 0 : index
    %12 = vector.load %arg7[%11, %c0] : memref<384x256xf32, #tpu.memory_space<vmem>>, vector<32x256xf32>
    %13 = arith.index_cast %7 : i32 to index
    %c0_3 = arith.constant 0 : index
    %14 = vector.load %arg7[%13, %c0_3] : memref<384x256xf32, #tpu.memory_space<vmem>>, vector<32x256xf32>
    %15 = arith.index_cast %10 : i32 to index
    %c0_4 = arith.constant 0 : index
    %16 = vector.load %arg7[%15, %c0_4] : memref<384x256xf32, #tpu.memory_space<vmem>>, vector<32x256xf32>
    %cst = arith.constant dense<0.000000e+00> : vector<256x256xf32>
    %17 = tpu.matmul %14, %12, %cst {dimension_numbers = #tpu.dot_dimension_numbers<[0], [0], [1], [1], [0, 1, 1, 1], [], []>} : vector<32x256xf32>, vector<32x256xf32>, vector<256x256xf32> -> vector<256x256xf32>
    %cst_5 = arith.constant dense<0xFF800000> : vector<256xf32>
    %18 = vector.multi_reduction <maximumf>, %17, %cst_5 [0] : vector<256x256xf32> to vector<256xf32>
    %19 = vector.shape_cast %18 : vector<256xf32> to vector<1x256xf32>
    %20 = vector.broadcast %19 : vector<1x256xf32> to vector<256x256xf32>
    %21 = arith.subf %17, %20 : vector<256x256xf32>
    %22 = math.exp %21 : vector<256x256xf32>
    %cst_6 = arith.constant dense<0.000000e+00> : vector<256xf32>
    %23 = vector.multi_reduction <add>, %22, %cst_6 [0] : vector<256x256xf32> to vector<256xf32>
    %24 = vector.shape_cast %23 : vector<256xf32> to vector<1x256xf32>
    %cst_7 = arith.constant dense<0.000000e+00> : vector<32x256xf32>
    %25 = tpu.matmul %16, %22, %cst_7 {dimension_numbers = #tpu.dot_dimension_numbers<[1], [0], [0], [1], [0, 0, 1, 1], [], []>} : vector<32x256xf32>, vector<256x256xf32>, vector<32x256xf32> -> vector<32x256xf32>
    %26 = tpu.reciprocal %24 {approx = true} : vector<1x256xf32> -> vector<1x256xf32>
    %27 = vector.broadcast %26 : vector<1x256xf32> to vector<32x256xf32>
    %28 = arith.mulf %25, %27 : vector<32x256xf32>
    %29 = arith.index_cast %4 : i32 to index
    %c0_8 = arith.constant 0 : index
    %30 = vector.load %arg8[%29, %c0_8] : memref<128x256xf32, #tpu.memory_space<vmem>>, vector<32x256xf32>
    tpu.vector_store %arg8[%29, %c0_8], %28 {strides = array<i32>} : memref<128x256xf32, #tpu.memory_space<vmem>>, vector<32x256xf32>,
    %c3_i32 = arith.constant 3 : i32
    %31 = arith.cmpi eq, %arg1, %c3_i32 : i32
    %32 = arith.extui %31 : i1 to i32
    %c0_i32_9 = arith.constant 0 : i32
    %33 = arith.cmpi ne, %32, %c0_i32_9 : i32
    scf.if %33 {
      %c0_10 = arith.constant 0 : index
      %c0_11 = arith.constant 0 : index
      %34 = vector.load %arg4[%c0_10, %c0_11] : memref<4x128xf32, #tpu.memory_space<vmem>>, vector<4x128xf32>
      %c0_12 = arith.constant 0 : index
      %c0_13 = arith.constant 0 : index
      %35 = vector.load %arg8[%c0_12, %c0_13] : memref<128x256xf32, #tpu.memory_space<vmem>>, vector<128x256xf32>
      %cst_14 = arith.constant dense<0.000000e+00> : vector<4x256xf32>
      %36 = tpu.matmul %34, %35, %cst_14 {dimension_numbers = #tpu.dot_dimension_numbers<[1], [0], [0], [1], [0, 0, 1, 1], [], []>} : vector<4x128xf32>, vector<128x256xf32>, vector<4x256xf32> -> vector<4x256xf32>
      %c0_15 = arith.constant 0 : index
      %c0_16 = arith.constant 0 : index
      %37 = vector.load %arg5[%c0_15, %c0_16] : memref<4x1xf32, #tpu.memory_space<vmem>>, vector<4x1xf32>
      %38 = vector.broadcast %37 : vector<4x1xf32> to vector<4x256xf32>
      %39 = arith.addf %36, %38 : vector<4x256xf32>
      %c0_17 = arith.constant 0 : index
      %c0_18 = arith.constant 0 : index
      %c0_19 = arith.constant 0 : index
      %40 = vector.load %arg6[%c0_17, %c0_18, %c0_19] : memref<1x4x256xf32, #tpu.memory_space<vmem>>, vector<1x4x256xf32>
      %41 = vector.shape_cast %40 : vector<1x4x256xf32> to vector<4x256xf32>
      %42 = vector.shape_cast %39 : vector<4x256xf32> to vector<1x4x256xf32>
      tpu.vector_store %arg6[%c0_17, %c0_18, %c0_19], %42 {strides = array<i32>} : memref<1x4x256xf32, #tpu.memory_space<vmem>>, vector<1x4x256xf32>,
    } else {
    }
    return
  }
  func.func @transform_0(%arg0: i32, %arg1: i32) -> (i32, i32, i32) {
    %c0_i32 = arith.constant 0 : i32
    %c0_i32_0 = arith.constant 0 : i32
    %c0_i32_1 = arith.constant 0 : i32
    return %arg0, %c0_i32, %c0_i32_0 : i32, i32, i32
  }
  func.func @transform_1(%arg0: i32, %arg1: i32) -> (i32, i32) {
    %c0_i32 = arith.constant 0 : i32
    %c0_i32_0 = arith.constant 0 : i32
    %c0_i32_1 = arith.constant 0 : i32
    return %c0_i32, %c0_i32_0 : i32, i32
  }
  func.func @transform_2(%arg0: i32, %arg1: i32) -> (i32, i32) {
    %c0_i32 = arith.constant 0 : i32
    %c0_i32_0 = arith.constant 0 : i32
    %c0_i32_1 = arith.constant 0 : i32
    return %c0_i32, %c0_i32_0 : i32, i32
  }
  func.func @transform_3(%arg0: i32, %arg1: i32) -> (i32, i32) {
    %c0_i32 = arith.constant 0 : i32
    %c0_i32_0 = arith.constant 0 : i32
    %c0_i32_1 = arith.constant 0 : i32
    return %c0_i32, %c0_i32_0 : i32, i32
  }
  func.func @transform_4(%arg0: i32, %arg1: i32) -> (i32, i32, i32) {
    %c0_i32 = arith.constant 0 : i32
    %c0_i32_0 = arith.constant 0 : i32
    %c0_i32_1 = arith.constant 0 : i32
    return %arg0, %c0_i32, %c0_i32_0 : i32, i32, i32
  }
}

</mosaic_0001>

<llo_original>
// kernel: tpu_custom_call.1
$region0: #{tpu_custom_call.1}
  #allocation0 [shape = 'u32[]', space=smem, size = 0x4, offset = 0x4, fixed_abs, tag = 'smem constant byte address 0x4 - core index']
  #allocation1 [shape = 'u32[144,128]{1,0:T(1,128)}', space=vmem, size = 0x12000, scoped, tag = 'internal scratch']
  #allocation2 [shape = 'f32[384,256]{1,0:T(8,128)}', space=vmem, size = 0x60000, scoped, tag = 'scratch operand']
  #allocation3 [shape = 'f32[128,256]{1,0:T(8,128)}', space=vmem, size = 0x20000, scoped, tag = 'scratch operand']
  %s0 = inlined_call_operand.vmem [shape: f32[2,4,256], index: 0, kind: input, shape index: {}]
  %s1 = inlined_call_operand.vmem [shape: f32[384,4], index: 1, kind: input, shape index: {}]
  %s2 = inlined_call_operand.vmem [shape: f32[4,128], index: 2, kind: input, shape index: {}]
  %s3 = inlined_call_operand.vmem [shape: f32[4,1], index: 3, kind: input, shape index: {}]
  %s4 = inlined_call_operand.hbm [shape: f32[2,4,256], index: 4, kind: output, shape index: {}]
  %s5 = sld [smem:[#allocation0]]
  $region57: #{tpu_custom_call.1} parent=0
    _
  %s7 = ssub.s32 1, %s5
  %s8 = scalar_select 0, %s7, %s5
  $region1: #{tpu_custom_call.1} parent=0
    #allocation4 [shape = 'u8[8192]{0}', space=vmem, size = 0x2000, scoped, tag = 'output window, operand 0']
    #allocation5 [shape = 's32[2]{0}', space=sflag, size = 0x8, scoped, tag = 'scoped memory for tpu_custom_call.1']
    %9 = vsyncpa [#allocation5], 0
    %s10 = scalar_lea.sflag [#allocation5], 1
    %11 = vsyncpa %s10, 0
    loop: start=0, step=1, limit=10
    $region2: #{tpu_custom_call.1} parent=1 // loop_pre_header
      _
    $region3: #{tpu_custom_call.1} parent=1 // loop_header
      %s13 = sphi 0, %s17
      %p14 = scmp.ge.s32.totalorder %s13, 10
      %s20 = sphi 0, %s32
      %s21 = sphi 0, %s28
      %s22 = sphi 0, %s20
      %s23 = sphi 0, %s21
      %s24 = sphi 0, %s22
      %s25 = sphi 0, %s23
      %s35 = sphi 0, %s37
      %s38 = sphi 0, %s35
      %s39 = sphi 0, %s38
      %s55 = sphi 0, %s39
      %s59 = sphi 0, %s59
      %s61 = sphi 0, %s59
      %s62 = sphi 0, %s61
      %s76 = sphi 0, %s62
      %s80 = sphi 0, %s80
      %s82 = sphi 0, %s80
      %s83 = sphi 0, %s82
      %s97 = sphi 0, %s83
      %s101 = sphi 0, %s101
      %s103 = sphi 0, %s101
      %s104 = sphi 0, %s103
      %s118 = sphi 0, %s104
      %s124 = sphi 0, %s126
      %s127 = sphi 0, %s124
      %s128 = sphi 0, %s127
      %s144 = sphi 0, %s128
    $region4: #{tpu_custom_call.1} parent=1 // loop_header_branch
      %16 = sbr.rel (%p14) target = $region8
    $region5: #{tpu_custom_call.1} parent=1 // loop_body
      %s18 = ssub.s32 %s13, 1
      %s19 = ssub.s32 %s13, 2
      %s26 = sadd.s32 1, %s21
      %p27 = scmp.ge.s32.totalorder %s26, 4
      %s28 = scalar_select %p27, 0, %s26
      %s29 = sadd.s32 1, %s20
      %s30 = scalar_select %p27, %s29, %s20
      %p31 = scmp.ge.s32.totalorder %s30, 2
      %s32 = scalar_select %p31, 0, %s30
      %s33 = ssub.s32 %s20, %s32
      %p34 = scmp.eq.s32.totalorder %s33, 0
      %s36 = sadd.s32 %s35, 1
      %s37 = scalar_select %p34, %s35, %s36
      %p40 = pneg %p34
      %p41 = scmp.eq.s32.totalorder %s13, 7
      %p42 = por %p40, %p41
      %p43 = scmp.ne.s32.totalorder %s35, %s38
      %p44 = scmp.eq.s32.totalorder %s13, 0
      %p45 = por %p43, %p44
      %p46 = scmp.ne.s32.totalorder %s35, %s38
      %p47 = scmp.eq.s32.totalorder %s18, 7
      %p48 = por %p46, %p47
      %p49 = scmp.ne.s32.totalorder %s38, %s39
      %p50 = scmp.eq.s32.totalorder %s18, 0
      %p51 = por %p49, %p50
      %p52 = scmp.ne.s32.totalorder %s38, %s39
      %p53 = scmp.eq.s32.totalorder %s19, 7
      %p54 = por %p52, %p53
      %p56 = scmp.ne.s32.totalorder %s39, %s55
      %p57 = scmp.eq.s32.totalorder %s19, 0
      %p58 = por %p56, %p57
      %s60 = sadd.s32 %s59, 1
      %p63 = scmp.eq.s32.totalorder %s13, 7
      %p64 = scmp.ne.s32.totalorder %s59, %s61
      %p65 = scmp.eq.s32.totalorder %s13, 0
      %p66 = por %p64, %p65
      %p67 = scmp.ne.s32.totalorder %s59, %s61
      %p68 = scmp.eq.s32.totalorder %s18, 7
      %p69 = por %p67, %p68
      %p70 = scmp.ne.s32.totalorder %s61, %s62
      %p71 = scmp.eq.s32.totalorder %s18, 0
      %p72 = por %p70, %p71
      %p73 = scmp.ne.s32.totalorder %s61, %s62
      %p74 = scmp.eq.s32.totalorder %s19, 7
      %p75 = por %p73, %p74
      %p77 = scmp.ne.s32.totalorder %s62, %s76
      %p78 = scmp.eq.s32.totalorder %s19, 0
      %p79 = por %p77, %p78
      %s81 = sadd.s32 %s80, 1
      %p84 = scmp.eq.s32.totalorder %s13, 7
      %p85 = scmp.ne.s32.totalorder %s80, %s82
      %p86 = scmp.eq.s32.totalorder %s13, 0
      %p87 = por %p85, %p86
      %p88 = scmp.ne.s32.totalorder %s80, %s82
      %p89 = scmp.eq.s32.totalorder %s18, 7
      %p90 = por %p88, %p89
      %p91 = scmp.ne.s32.totalorder %s82, %s83
      %p92 = scmp.eq.s32.totalorder %s18, 0
      %p93 = por %p91, %p92
      %p94 = scmp.ne.s32.totalorder %s82, %s83
      %p95 = scmp.eq.s32.totalorder %s19, 7
      %p96 = por %p94, %p95
      %p98 = scmp.ne.s32.totalorder %s83, %s97
      %p99 = scmp.eq.s32.totalorder %s19, 0
      %p100 = por %p98, %p99
      %s102 = sadd.s32 %s101, 1
      %p105 = scmp.eq.s32.totalorder %s13, 7
      %p106 = scmp.ne.s32.totalorder %s101, %s103
      %p107 = scmp.eq.s32.totalorder %s13, 0
      %p108 = por %p106, %p107
      %p109 = scmp.ne.s32.totalorder %s101, %s103
      %p110 = scmp.eq.s32.totalorder %s18, 7
      %p111 = por %p109, %p110
      %p112 = scmp.ne.s32.totalorder %s103, %s104
      %p113 = scmp.eq.s32.totalorder %s18, 0
      %p114 = por %p112, %p113
      %p115 = scmp.ne.s32.totalorder %s103, %s104
      %p116 = scmp.eq.s32.totalorder %s19, 7
      %p117 = por %p115, %p116
      %p119 = scmp.ne.s32.totalorder %s104, %s118
      %p120 = scmp.eq.s32.totalorder %s19, 0
      %p121 = por %p119, %p120
      %s122 = ssub.s32 %s20, %s32
      %p123 = scmp.eq.s32.totalorder %s122, 0
      %s125 = sadd.s32 %s124, 1
      %s126 = scalar_select %p123, %s124, %s125
      %p129 = pneg %p123
      %p130 = scmp.eq.s32.totalorder %s13, 7
      %p131 = por %p129, %p130
      %p132 = scmp.ne.s32.totalorder %s124, %s127
      %p133 = scmp.eq.s32.totalorder %s13, 0
      %p134 = por %p132, %p133
      %p135 = scmp.ne.s32.totalorder %s124, %s127
      %p136 = scmp.eq.s32.totalorder %s18, 7
      %p137 = por %p135, %p136
      %p138 = scmp.ne.s32.totalorder %s127, %s128
      %p139 = scmp.eq.s32.totalorder %s18, 0
      %p140 = por %p138, %p139
      %p141 = scmp.ne.s32.totalorder %s127, %s128
      %p142 = scmp.eq.s32.totalorder %s19, 7
      %p143 = por %p141, %p142
      %p145 = scmp.ne.s32.totalorder %s128, %s144
      %p146 = scmp.eq.s32.totalorder %s19, 0
      %p147 = por %p145, %p146
      %p148 = scmp.le.s32.totalorder 1, %s13
      %p149 = scmp.lt.s32.totalorder %s13, 9
      %p150 = pnand %p148, %p149
      %p151 = pneg %p150
      // Predicated region
      $region9: #{tpu_custom_call.1} parent=5 // pred_check
        _
      $region10: #{tpu_custom_call.1} parent=5 // pred_check_branch
        %153 = sbr.rel (%p150) target = $region12
      $region11: #{tpu_custom_call.1} parent=5 // pred_region
        %s154 = ssub.s32 %s13, 1
        // Predicated region
        $region13: #{tpu_custom_call.1} parent=11 // pred_check
          %p155 = pneg %p72
        $region14: #{tpu_custom_call.1} parent=11 // pred_check_branch
          %157 = sbr.rel (%p155) target = $region16
        $region15: #{tpu_custom_call.1} parent=11 // pred_region
          _
        $region16: #{tpu_custom_call.1} parent=11 // pred_fallthru
          _
        // Predicated region
        $region17: #{tpu_custom_call.1} parent=11 // pred_check
          %p158 = pneg %p93
        $region18: #{tpu_custom_call.1} parent=11 // pred_check_branch
          %160 = sbr.rel (%p158) target = $region20
        $region19: #{tpu_custom_call.1} parent=11 // pred_region
          _
        $region20: #{tpu_custom_call.1} parent=11 // pred_fallthru
          _
        // Predicated region
        $region21: #{tpu_custom_call.1} parent=11 // pred_check
          %p161 = pneg %p114
        $region22: #{tpu_custom_call.1} parent=11 // pred_check_branch
          %163 = sbr.rel (%p161) target = $region24
        $region23: #{tpu_custom_call.1} parent=11 // pred_region
          _
        $region24: #{tpu_custom_call.1} parent=11 // pred_fallthru
          _
      $region12: #{tpu_custom_call.1} parent=5 // pred_fallthru
        _
      %p164 = scmp.lt.s32.totalorder %s13, 8
      // Predicated region
      $region25: #{tpu_custom_call.1} parent=5 // pred_check
        %p165 = pneg %p164
      $region26: #{tpu_custom_call.1} parent=5 // pred_check_branch
        %167 = sbr.rel (%p165) target = $region28
      $region27: #{tpu_custom_call.1} parent=5 // pred_region
        // Predicated region
        $region29: #{tpu_custom_call.1} parent=27 // pred_check
          %p168 = pneg %p45
        $region30: #{tpu_custom_call.1} parent=27 // pred_check_branch
          %170 = sbr.rel (%p168) target = $region32
        $region31: #{tpu_custom_call.1} parent=27 // pred_region
          %p171 = scmp.lt.s32.totalorder %s20, 1
          %s172 = scalar_select %p171, %s20, 1
          %s173 = smul.addr %s172, 2
          %s174 = smul.addr %s173, 4
          %s175 = scalar_lea.vmem %s0, %s174
        $region32: #{tpu_custom_call.1} parent=27 // pred_fallthru
          _
      $region28: #{tpu_custom_call.1} parent=5 // pred_fallthru
        _
      %p176 = scmp.le.s32.totalorder 1, %s13
      %p177 = scmp.lt.s32.totalorder %s13, 9
      %p178 = pnand %p176, %p177
      %p179 = pneg %p178
      // Predicated region
      $region33: #{tpu_custom_call.1} parent=5 // pred_check
        _
      $region34: #{tpu_custom_call.1} parent=5 // pred_check_branch
        %181 = sbr.rel (%p178) target = $region36
      $region35: #{tpu_custom_call.1} parent=5 // pred_region
        %s182 = ssub.s32 %s13, 1
        %p183 = scmp.lt.s32.totalorder %s22, 1
        %s184 = scalar_select %p183, %s22, 1
        %s185 = smul.addr %s184, 2
        %s186 = smul.addr %s185, 4
        %s187 = scalar_lea.vmem %s0, %s186
        %p188 = pneg %p51
        %p189 = pneg %p48
        %p190 = pneg %p72
        %p191 = pneg %p69
        %p192 = pneg %p93
        %p193 = pneg %p90
        %p194 = pneg %p114
        %p195 = pneg %p111
        %p196 = pneg %p140
        %p197 = pneg %p137
        %s198 = sand.u32 %s127, 1
        %s199 = scalar_lea.sflag [#allocation5], %s198
        %s200 = sand.u32 %s127, 1
        %s201 = smul.addr %s200, 8
        %s202 = scalar_lea.vmem [#allocation4], %s201
        %p203 = scmp.lt.s32.totalorder %s22, 1
        %s204 = scalar_select %p203, %s22, 1
        %s205 = smul.addr %s204, 2
        %s206 = smul.addr %s205, 4
        %s207 = scalar_lea.vmem %s0, %s206
        %p208 = scmp.eq.s32.totalorder %s23, 0
        // Predicated region
        $region37: #{tpu_custom_call.1} parent=35 // pred_check
          %p209 = pneg %p208
        $region38: #{tpu_custom_call.1} parent=35 // pred_check_branch
          %211 = sbr.rel (%p209) target = $region40
        $region39: #{tpu_custom_call.1} parent=35 // pred_region
          %v212 = vld [vmem:[%s1] sm:$0xff]
          %v213 = vld [vmem:[%s1 + $0x8] sm:$0xff]
          %v214 = vld [vmem:[%s1 + $0x10] sm:$0xff]
          %v215 = vld [vmem:[%s1 + $0x18] sm:$0xff]
          %v216 = vld [vmem:[%s1 + $0x20] sm:$0xff]
          %v217 = vld [vmem:[%s1 + $0x28] sm:$0xff]
          %v218 = vld [vmem:[%s1 + $0x30] sm:$0xff]
          %v219 = vld [vmem:[%s1 + $0x38] sm:$0xff]
          %v220 = vld [vmem:[%s1 + $0x40] sm:$0xff]
          %v221 = vld [vmem:[%s1 + $0x48] sm:$0xff]
          %v222 = vld [vmem:[%s1 + $0x50] sm:$0xff]
          %v223 = vld [vmem:[%s1 + $0x58] sm:$0xff]
          %v224 = vld [vmem:[%s1 + $0x60] sm:$0xff]
          %v225 = vld [vmem:[%s1 + $0x68] sm:$0xff]
          %v226 = vld [vmem:[%s1 + $0x70] sm:$0xff]
          %v227 = vld [vmem:[%s1 + $0x78] sm:$0xff]
          %v228 = vld [vmem:[%s1 + $0x80] sm:$0xff]
          %v229 = vld [vmem:[%s1 + $0x88] sm:$0xff]
          %v230 = vld [vmem:[%s1 + $0x90] sm:$0xff]
          %v231 = vld [vmem:[%s1 + $0x98] sm:$0xff]
          %v232 = vld [vmem:[%s1 + $0xa0] sm:$0xff]
          %v233 = vld [vmem:[%s1 + $0xa8] sm:$0xff]
          %v234 = vld [vmem:[%s1 + $0xb0] sm:$0xff]
          %v235 = vld [vmem:[%s1 + $0xb8] sm:$0xff]
          %v236 = vld [vmem:[%s1 + $0xc0] sm:$0xff]
          %v237 = vld [vmem:[%s1 + $0xc8] sm:$0xff]
          %v238 = vld [vmem:[%s1 + $0xd0] sm:$0xff]
          %v239 = vld [vmem:[%s1 + $0xd8] sm:$0xff]
          %v240 = vld [vmem:[%s1 + $0xe0] sm:$0xff]
          %v241 = vld [vmem:[%s1 + $0xe8] sm:$0xff]
          %v242 = vld [vmem:[%s1 + $0xf0] sm:$0xff]
          %v243 = vld [vmem:[%s1 + $0xf8] sm:$0xff]
          %v244 = vld [vmem:[%s1 + $0x100] sm:$0xff]
          %v245 = vld [vmem:[%s1 + $0x108] sm:$0xff]
          %v246 = vld [vmem:[%s1 + $0x110] sm:$0xff]
          %v247 = vld [vmem:[%s1 + $0x118] sm:$0xff]
          %v248 = vld [vmem:[%s1 + $0x120] sm:$0xff]
          %v249 = vld [vmem:[%s1 + $0x128] sm:$0xff]
          %v250 = vld [vmem:[%s1 + $0x130] sm:$0xff]
          %v251 = vld [vmem:[%s1 + $0x138] sm:$0xff]
          %v252 = vld [vmem:[%s1 + $0x140] sm:$0xff]
          %v253 = vld [vmem:[%s1 + $0x148] sm:$0xff]
          %v254 = vld [vmem:[%s1 + $0x150] sm:$0xff]
          %v255 = vld [vmem:[%s1 + $0x158] sm:$0xff]
          %v256 = vld [vmem:[%s1 + $0x160] sm:$0xff]
          %v257 = vld [vmem:[%s1 + $0x168] sm:$0xff]
          %v258 = vld [vmem:[%s1 + $0x170] sm:$0xff]
          %v259 = vld [vmem:[%s1 + $0x178] sm:$0xff]
          %v260 = vld [vmem:[%s207] sm:$0xff]
          %v262 = vcombine.high %v260, %v260
          %vm263 = vcmask 31744
          %v265 = vsel %vm263, %v212, 0
          %v268 = vsel %vm263, %v213, 0
          %v271 = vsel %vm263, %v214, 0
          %v274 = vsel %vm263, %v215, 0
          %v277 = vsel %vm263, %v216, 0
          %v280 = vsel %vm263, %v217, 0
          %v283 = vsel %vm263, %v218, 0
          %v286 = vsel %vm263, %v219, 0
          %v289 = vsel %vm263, %v220, 0
          %v292 = vsel %vm263, %v221, 0
          %v295 = vsel %vm263, %v222, 0
          %v298 = vsel %vm263, %v223, 0
          %v301 = vsel %vm263, %v224, 0
          %v304 = vsel %vm263, %v225, 0
          %v307 = vsel %vm263, %v226, 0
          %v310 = vsel %vm263, %v227, 0
          %v313 = vsel %vm263, %v228, 0
          %v316 = vsel %vm263, %v229, 0
          %v319 = vsel %vm263, %v230, 0
          %v322 = vsel %vm263, %v231, 0
          %v325 = vsel %vm263, %v232, 0
          %v328 = vsel %vm263, %v233, 0
          %v331 = vsel %vm263, %v234, 0
          %v334 = vsel %vm263, %v235, 0
          %v337 = vsel %vm263, %v236, 0
          %v340 = vsel %vm263, %v237, 0
          %v343 = vsel %vm263, %v238, 0
          %v346 = vsel %vm263, %v239, 0
          %v349 = vsel %vm263, %v240, 0
          %v352 = vsel %vm263, %v241, 0
          %v355 = vsel %vm263, %v242, 0
          %v358 = vsel %vm263, %v243, 0
          %v361 = vsel %vm263, %v244, 0
          %v364 = vsel %vm263, %v245, 0
          %v367 = vsel %vm263, %v246, 0
          %v370 = vsel %vm263, %v247, 0
          %v373 = vsel %vm263, %v248, 0
          %v376 = vsel %vm263, %v249, 0
          %v379 = vsel %vm263, %v250, 0
          %v382 = vsel %vm263, %v251, 0
          %v385 = vsel %vm263, %v252, 0
          %v388 = vsel %vm263, %v253, 0
          %v391 = vsel %vm263, %v254, 0
          %v394 = vsel %vm263, %v255, 0
          %v397 = vsel %vm263, %v256, 0
          %v400 = vsel %vm263, %v257, 0
          %v403 = vsel %vm263, %v258, 0
          %v406 = vsel %vm263, %v259, 0
          %vm408 = vcmask 1043456
          %v409 = vsel %vm408, %v260, 0
          %v411 = vsel %vm408, %v262, 0
          %413 = vmatprep.subr.mxu0 0.0
          %414 = vmatpush1.msra.mxu0 0.0
          %415 = vmatprep.subr.mxu0 0.0
          %416 = vmatpush1.msra.mxu0 0.0
          %417 = vmatprep.subr.mxu0 0.0
          %418 = vmatpush1.msra.mxu0 0.0
          %419 = vmatprep.subr.mxu0 0.0
          %420 = vmatpush1.msra.mxu0 0.0
          %421 = vmatprep.subr.mxu0 0.0
          %422 = vmatpush1.msra.mxu0 0.0
          %423 = vmatprep.subr.mxu0 0.0
          %424 = vmatpush1.msra.mxu0 0.0
          %425 = vmatprep.subr.mxu0 0.0
          %426 = vmatpush1.msra.mxu0 0.0
          %427 = vmatprep.subr.mxu0 0.0
          %428 = vmatpush1.msra.mxu0 0.0
          %429 = vmatprep.subr.mxu0 0.0
          %430 = vmatpush1.msra.mxu0 0.0
          %431 = vmatprep.subr.mxu0 0.0
          %432 = vmatpush1.msra.mxu0 0.0
          %433 = vmatprep.subr.mxu0 0.0
          %434 = vmatpush1.msra.mxu0 0.0
          %435 = vmatprep.subr.mxu0 0.0
          %436 = vmatpush1.msra.mxu0 0.0
          %437 = vmatprep.subr.mxu0 0.0
          %438 = vmatpush1.msra.mxu0 0.0
          %439 = vmatprep.subr.mxu0 0.0
          %440 = vmatpush1.msra.mxu0 0.0
          %441 = vmatprep.subr.mxu0 0.0
          %442 = vmatpush1.msra.mxu0 0.0
          %443 = vmatprep.subr.mxu0 %v411
          %444 = vmatpush1.msra.mxu0 %v409
          %445 = vmatprep.subr.mxu0 0.0
          %446 = vmatpush2.msra.mxu0 0.0
          %447 = vmatprep.subr.mxu0 0.0
          %448 = vmatpush2.msra.mxu0 0.0
          %449 = vmatprep.subr.mxu0 0.0
          %450 = vmatpush2.msra.mxu0 0.0
          %451 = vmatprep.subr.mxu0 0.0
          %452 = vmatpush2.msra.mxu0 0.0
          %453 = vmatprep.subr.mxu0 0.0
          %454 = vmatpush2.msra.mxu0 0.0
          %455 = vmatprep.subr.mxu0 0.0
          %456 = vmatpush2.msra.mxu0 0.0
          %457 = vmatprep.subr.mxu0 0.0
          %458 = vmatpush2.msra.mxu0 0.0
          %459 = vmatprep.subr.mxu0 0.0
          %460 = vmatpush2.msra.mxu0 0.0
          %461 = vmatprep.subr.mxu0 0.0
          %462 = vmatpush2.msra.mxu0 0.0
          %463 = vmatprep.subr.mxu0 0.0
          %464 = vmatpush2.msra.mxu0 0.0
          %465 = vmatprep.subr.mxu0 0.0
          %466 = vmatpush2.msra.mxu0 0.0
          %467 = vmatprep.subr.mxu0 0.0
          %468 = vmatpush2.msra.mxu0 0.0
          %469 = vmatprep.subr.mxu0 0.0
          %470 = vmatpush2.msra.mxu0 0.0
          %471 = vmatprep.subr.mxu0 0.0
          %472 = vmatpush2.msra.mxu0 0.0
          %473 = vmatprep.subr.mxu0 0.0
          %474 = vmatpush2.msra.mxu0 0.0
          %475 = vmatprep.subr.mxu0 0.0
          %476 = vmatpush2.msra.mxu0 0.0
          %477 = vmatprep.mubr.f32.mxu0 0.0
          %478 = vmatmul.mubr.f32.gmra.mxu0 %v265
          %v479 = vpop.f32.mrf.mxu0
          %v480 = vadd.f32 0.0, %v479
          %v481 = vpop.f32.mrf.mxu0
          %v482 = vadd.f32 0.0, %v481
          %483 = vmatprep.mubr.f32.mxu0 0.0
          %484 = vmatmul.mubr.f32.gmra.mxu0 %v268
          %v485 = vpop.f32.mrf.mxu0
          %v486 = vadd.f32 0.0, %v485
          %v487 = vpop.f32.mrf.mxu0
          %v488 = vadd.f32 0.0, %v487
          %489 = vmatprep.mubr.f32.mxu0 0.0
          %490 = vmatmul.mubr.f32.gmra.mxu0 %v271
          %v491 = vpop.f32.mrf.mxu0
          %v492 = vadd.f32 0.0, %v491
          %v493 = vpop.f32.mrf.mxu0
          %v494 = vadd.f32 0.0, %v493
          %495 = vmatprep.mubr.f32.mxu0 0.0
          %496 = vmatmul.mubr.f32.gmra.mxu0 %v274
          %v497 = vpop.f32.mrf.mxu0
          %v498 = vadd.f32 0.0, %v497
          %v499 = vpop.f32.mrf.mxu0
          %v500 = vadd.f32 0.0, %v499
          %501 = vmatprep.mubr.f32.mxu0 0.0
          %502 = vmatmul.mubr.f32.gmra.mxu0 %v277
          %v503 = vpop.f32.mrf.mxu0
          %v504 = vadd.f32 0.0, %v503
          %v505 = vpop.f32.mrf.mxu0
          %v506 = vadd.f32 0.0, %v505
          %507 = vmatprep.mubr.f32.mxu0 0.0
          %508 = vmatmul.mubr.f32.gmra.mxu0 %v280
          %v509 = vpop.f32.mrf.mxu0
          %v510 = vadd.f32 0.0, %v509
          %v511 = vpop.f32.mrf.mxu0
          %v512 = vadd.f32 0.0, %v511
          %513 = vmatprep.mubr.f32.mxu0 0.0
          %514 = vmatmul.mubr.f32.gmra.mxu0 %v283
          %v515 = vpop.f32.mrf.mxu0
          %v516 = vadd.f32 0.0, %v515
          %v517 = vpop.f32.mrf.mxu0
          %v518 = vadd.f32 0.0, %v517
          %519 = vmatprep.mubr.f32.mxu0 0.0
          %520 = vmatmul.mubr.f32.gmra.mxu0 %v286
          %v521 = vpop.f32.mrf.mxu0
          %v522 = vadd.f32 0.0, %v521
          %v523 = vpop.f32.mrf.mxu0
          %v524 = vadd.f32 0.0, %v523
          %525 = vmatprep.mubr.f32.mxu0 0.0
          %526 = vmatmul.mubr.f32.gmra.mxu0 %v289
          %v527 = vpop.f32.mrf.mxu0
          %v528 = vadd.f32 0.0, %v527
          %v529 = vpop.f32.mrf.mxu0
          %v530 = vadd.f32 0.0, %v529
          %531 = vmatprep.mubr.f32.mxu0 0.0
          %532 = vmatmul.mubr.f32.gmra.mxu0 %v292
          %v533 = vpop.f32.mrf.mxu0
          %v534 = vadd.f32 0.0, %v533
          %v535 = vpop.f32.mrf.mxu0
          %v536 = vadd.f32 0.0, %v535
          %537 = vmatprep.mubr.f32.mxu0 0.0
          %538 = vmatmul.mubr.f32.gmra.mxu0 %v295
          %v539 = vpop.f32.mrf.mxu0
          %v540 = vadd.f32 0.0, %v539
          %v541 = vpop.f32.mrf.mxu0
          %v542 = vadd.f32 0.0, %v541
          %543 = vmatprep.mubr.f32.mxu0 0.0
          %544 = vmatmul.mubr.f32.gmra.mxu0 %v298
          %v545 = vpop.f32.mrf.mxu0
          %v546 = vadd.f32 0.0, %v545
          %v547 = vpop.f32.mrf.mxu0
          %v548 = vadd.f32 0.0, %v547
          %549 = vmatprep.mubr.f32.mxu0 0.0
          %550 = vmatmul.mubr.f32.gmra.mxu0 %v301
          %v551 = vpop.f32.mrf.mxu0
          %v552 = vadd.f32 0.0, %v551
          %v553 = vpop.f32.mrf.mxu0
          %v554 = vadd.f32 0.0, %v553
          %555 = vmatprep.mubr.f32.mxu0 0.0
          %556 = vmatmul.mubr.f32.gmra.mxu0 %v304
          %v557 = vpop.f32.mrf.mxu0
          %v558 = vadd.f32 0.0, %v557
          %v559 = vpop.f32.mrf.mxu0
          %v560 = vadd.f32 0.0, %v559
          %561 = vmatprep.mubr.f32.mxu0 0.0
          %562 = vmatmul.mubr.f32.gmra.mxu0 %v307
          %v563 = vpop.f32.mrf.mxu0
          %v564 = vadd.f32 0.0, %v563
          %v565 = vpop.f32.mrf.mxu0
          %v566 = vadd.f32 0.0, %v565
          %567 = vmatprep.mubr.f32.mxu0 0.0
          %568 = vmatmul.mubr.f32.gmra.mxu0 %v310
          %v569 = vpop.f32.mrf.mxu0
          %v570 = vadd.f32 0.0, %v569
          %v571 = vpop.f32.mrf.mxu0
          %v572 = vadd.f32 0.0, %v571
          %573 = vmatprep.mubr.f32.mxu0 0.0
          %574 = vmatmul.mubr.f32.gmra.mxu0 %v313
          %v575 = vpop.f32.mrf.mxu0
          %v576 = vadd.f32 0.0, %v575
          %v577 = vpop.f32.mrf.mxu0
          %v578 = vadd.f32 0.0, %v577
          %579 = vmatprep.mubr.f32.mxu0 0.0
          %580 = vmatmul.mubr.f32.gmra.mxu0 %v316
          %v581 = vpop.f32.mrf.mxu0
          %v582 = vadd.f32 0.0, %v581
          %v583 = vpop.f32.mrf.mxu0
          %v584 = vadd.f32 0.0, %v583
          %585 = vmatprep.mubr.f32.mxu0 0.0
          %586 = vmatmul.mubr.f32.gmra.mxu0 %v319
          %v587 = vpop.f32.mrf.mxu0
          %v588 = vadd.f32 0.0, %v587
          %v589 = vpop.f32.mrf.mxu0
          %v590 = vadd.f32 0.0, %v589
          %591 = vmatprep.mubr.f32.mxu0 0.0
          %592 = vmatmul.mubr.f32.gmra.mxu0 %v322
          %v593 = vpop.f32.mrf.mxu0
          %v594 = vadd.f32 0.0, %v593
          %v595 = vpop.f32.mrf.mxu0
          %v596 = vadd.f32 0.0, %v595
          %597 = vmatprep.mubr.f32.mxu0 0.0
          %598 = vmatmul.mubr.f32.gmra.mxu0 %v325
          %v599 = vpop.f32.mrf.mxu0
          %v600 = vadd.f32 0.0, %v599
          %v601 = vpop.f32.mrf.mxu0
          %v602 = vadd.f32 0.0, %v601
          %603 = vmatprep.mubr.f32.mxu0 0.0
          %604 = vmatmul.mubr.f32.gmra.mxu0 %v328
          %v605 = vpop.f32.mrf.mxu0
          %v606 = vadd.f32 0.0, %v605
          %v607 = vpop.f32.mrf.mxu0
          %v608 = vadd.f32 0.0, %v607
          %609 = vmatprep.mubr.f32.mxu0 0.0
          %610 = vmatmul.mubr.f32.gmra.mxu0 %v331
          %v611 = vpop.f32.mrf.mxu0
          %v612 = vadd.f32 0.0, %v611
          %v613 = vpop.f32.mrf.mxu0
          %v614 = vadd.f32 0.0, %v613
          %615 = vmatprep.mubr.f32.mxu0 0.0
          %616 = vmatmul.mubr.f32.gmra.mxu0 %v334
          %v617 = vpop.f32.mrf.mxu0
          %v618 = vadd.f32 0.0, %v617
          %v619 = vpop.f32.mrf.mxu0
          %v620 = vadd.f32 0.0, %v619
          %621 = vmatprep.mubr.f32.mxu0 0.0
          %622 = vmatmul.mubr.f32.gmra.mxu0 %v337
          %v623 = vpop.f32.mrf.mxu0
          %v624 = vadd.f32 0.0, %v623
          %v625 = vpop.f32.mrf.mxu0
          %v626 = vadd.f32 0.0, %v625
          %627 = vmatprep.mubr.f32.mxu0 0.0
          %628 = vmatmul.mubr.f32.gmra.mxu0 %v340
          %v629 = vpop.f32.mrf.mxu0
          %v630 = vadd.f32 0.0, %v629
          %v631 = vpop.f32.mrf.mxu0
          %v632 = vadd.f32 0.0, %v631
          %633 = vmatprep.mubr.f32.mxu0 0.0
          %634 = vmatmul.mubr.f32.gmra.mxu0 %v343
          %v635 = vpop.f32.mrf.mxu0
          %v636 = vadd.f32 0.0, %v635
          %v637 = vpop.f32.mrf.mxu0
          %v638 = vadd.f32 0.0, %v637
          %639 = vmatprep.mubr.f32.mxu0 0.0
          %640 = vmatmul.mubr.f32.gmra.mxu0 %v346
          %v641 = vpop.f32.mrf.mxu0
          %v642 = vadd.f32 0.0, %v641
          %v643 = vpop.f32.mrf.mxu0
          %v644 = vadd.f32 0.0, %v643
          %645 = vmatprep.mubr.f32.mxu0 0.0
          %646 = vmatmul.mubr.f32.gmra.mxu0 %v349
          %v647 = vpop.f32.mrf.mxu0
          %v648 = vadd.f32 0.0, %v647
          %v649 = vpop.f32.mrf.mxu0
          %v650 = vadd.f32 0.0, %v649
          %651 = vmatprep.mubr.f32.mxu0 0.0
          %652 = vmatmul.mubr.f32.gmra.mxu0 %v352
          %v653 = vpop.f32.mrf.mxu0
          %v654 = vadd.f32 0.0, %v653
          %v655 = vpop.f32.mrf.mxu0
          %v656 = vadd.f32 0.0, %v655
          %657 = vmatprep.mubr.f32.mxu0 0.0
          %658 = vmatmul.mubr.f32.gmra.mxu0 %v355
          %v659 = vpop.f32.mrf.mxu0
          %v660 = vadd.f32 0.0, %v659
          %v661 = vpop.f32.mrf.mxu0
          %v662 = vadd.f32 0.0, %v661
          %663 = vmatprep.mubr.f32.mxu0 0.0
          %664 = vmatmul.mubr.f32.gmra.mxu0 %v358
          %v665 = vpop.f32.mrf.mxu0
          %v666 = vadd.f32 0.0, %v665
          %v667 = vpop.f32.mrf.mxu0
          %v668 = vadd.f32 0.0, %v667
          %669 = vmatprep.mubr.f32.mxu0 0.0
          %670 = vmatmul.mubr.f32.gmra.mxu0 %v361
          %v671 = vpop.f32.mrf.mxu0
          %v672 = vadd.f32 0.0, %v671
          %v673 = vpop.f32.mrf.mxu0
          %v674 = vadd.f32 0.0, %v673
          %675 = vmatprep.mubr.f32.mxu0 0.0
          %676 = vmatmul.mubr.f32.gmra.mxu0 %v364
          %v677 = vpop.f32.mrf.mxu0
          %v678 = vadd.f32 0.0, %v677
          %v679 = vpop.f32.mrf.mxu0
          %v680 = vadd.f32 0.0, %v679
          %681 = vmatprep.mubr.f32.mxu0 0.0
          %682 = vmatmul.mubr.f32.gmra.mxu0 %v367
          %v683 = vpop.f32.mrf.mxu0
          %v684 = vadd.f32 0.0, %v683
          %v685 = vpop.f32.mrf.mxu0
          %v686 = vadd.f32 0.0, %v685
          %687 = vmatprep.mubr.f32.mxu0 0.0
          %688 = vmatmul.mubr.f32.gmra.mxu0 %v370
          %v689 = vpop.f32.mrf.mxu0
          %v690 = vadd.f32 0.0, %v689
          %v691 = vpop.f32.mrf.mxu0
          %v692 = vadd.f32 0.0, %v691
          %693 = vmatprep.mubr.f32.mxu0 0.0
          %694 = vmatmul.mubr.f32.gmra.mxu0 %v373
          %v695 = vpop.f32.mrf.mxu0
          %v696 = vadd.f32 0.0, %v695
          %v697 = vpop.f32.mrf.mxu0
          %v698 = vadd.f32 0.0, %v697
          %699 = vmatprep.mubr.f32.mxu0 0.0
          %700 = vmatmul.mubr.f32.gmra.mxu0 %v376
          %v701 = vpop.f32.mrf.mxu0
          %v702 = vadd.f32 0.0, %v701
          %v703 = vpop.f32.mrf.mxu0
          %v704 = vadd.f32 0.0, %v703
          %705 = vmatprep.mubr.f32.mxu0 0.0
          %706 = vmatmul.mubr.f32.gmra.mxu0 %v379
          %v707 = vpop.f32.mrf.mxu0
          %v708 = vadd.f32 0.0, %v707
          %v709 = vpop.f32.mrf.mxu0
          %v710 = vadd.f32 0.0, %v709
          %711 = vmatprep.mubr.f32.mxu0 0.0
          %712 = vmatmul.mubr.f32.gmra.mxu0 %v382
          %v713 = vpop.f32.mrf.mxu0
          %v714 = vadd.f32 0.0, %v713
          %v715 = vpop.f32.mrf.mxu0
          %v716 = vadd.f32 0.0, %v715
          %717 = vmatprep.mubr.f32.mxu0 0.0
          %718 = vmatmul.mubr.f32.gmra.mxu0 %v385
          %v719 = vpop.f32.mrf.mxu0
          %v720 = vadd.f32 0.0, %v719
          %v721 = vpop.f32.mrf.mxu0
          %v722 = vadd.f32 0.0, %v721
          %723 = vmatprep.mubr.f32.mxu0 0.0
          %724 = vmatmul.mubr.f32.gmra.mxu0 %v388
          %v725 = vpop.f32.mrf.mxu0
          %v726 = vadd.f32 0.0, %v725
          %v727 = vpop.f32.mrf.mxu0
          %v728 = vadd.f32 0.0, %v727
          %729 = vmatprep.mubr.f32.mxu0 0.0
          %730 = vmatmul.mubr.f32.gmra.mxu0 %v391
          %v731 = vpop.f32.mrf.mxu0
          %v732 = vadd.f32 0.0, %v731
          %v733 = vpop.f32.mrf.mxu0
          %v734 = vadd.f32 0.0, %v733
          %735 = vmatprep.mubr.f32.mxu0 0.0
          %736 = vmatmul.mubr.f32.gmra.mxu0 %v394
          %v737 = vpop.f32.mrf.mxu0
          %v738 = vadd.f32 0.0, %v737
          %v739 = vpop.f32.mrf.mxu0
          %v740 = vadd.f32 0.0, %v739
          %741 = vmatprep.mubr.f32.mxu0 0.0
          %742 = vmatmul.mubr.f32.gmra.mxu0 %v397
          %v743 = vpop.f32.mrf.mxu0
          %v744 = vadd.f32 0.0, %v743
          %v745 = vpop.f32.mrf.mxu0
          %v746 = vadd.f32 0.0, %v745
          %747 = vmatprep.mubr.f32.mxu0 0.0
          %748 = vmatmul.mubr.f32.gmra.mxu0 %v400
          %v749 = vpop.f32.mrf.mxu0
          %v750 = vadd.f32 0.0, %v749
          %v751 = vpop.f32.mrf.mxu0
          %v752 = vadd.f32 0.0, %v751
          %753 = vmatprep.mubr.f32.mxu0 0.0
          %754 = vmatmul.mubr.f32.gmra.mxu0 %v403
          %v755 = vpop.f32.mrf.mxu0
          %v756 = vadd.f32 0.0, %v755
          %v757 = vpop.f32.mrf.mxu0
          %v758 = vadd.f32 0.0, %v757
          %759 = vmatprep.mubr.f32.mxu0 0.0
          %760 = vmatmul.mubr.f32.gmra.mxu0 %v406
          %v761 = vpop.f32.mrf.mxu0
          %v762 = vadd.f32 0.0, %v761
          %v763 = vpop.f32.mrf.mxu0
          %v764 = vadd.f32 0.0, %v763
          %765 = vdwg.mxu0
          %766 = vst [vmem:[#allocation2] sm:$0xff] %v480
          %767 = vst [vmem:[#allocation2 + $0x8] sm:$0xff] %v482
          %768 = vst [vmem:[#allocation2 + $0x10] sm:$0xff] %v486
          %769 = vst [vmem:[#allocation2 + $0x18] sm:$0xff] %v488
          %770 = vst [vmem:[#allocation2 + $0x20] sm:$0xff] %v492
          %771 = vst [vmem:[#allocation2 + $0x28] sm:$0xff] %v494
          %772 = vst [vmem:[#allocation2 + $0x30] sm:$0xff] %v498
          %773 = vst [vmem:[#allocation2 + $0x38] sm:$0xff] %v500
          %774 = vst [vmem:[#allocation2 + $0x40] sm:$0xff] %v504
          %775 = vst [vmem:[#allocation2 + $0x48] sm:$0xff] %v506
          %776 = vst [vmem:[#allocation2 + $0x50] sm:$0xff] %v510
          %777 = vst [vmem:[#allocation2 + $0x58] sm:$0xff] %v512
          %778 = vst [vmem:[#allocation2 + $0x60] sm:$0xff] %v516
          %779 = vst [vmem:[#allocation2 + $0x68] sm:$0xff] %v518
          %780 = vst [vmem:[#allocation2 + $0x70] sm:$0xff] %v522
          %781 = vst [vmem:[#allocation2 + $0x78] sm:$0xff] %v524
          %782 = vst [vmem:[#allocation2 + $0x80] sm:$0xff] %v528
          %783 = vst [vmem:[#allocation2 + $0x88] sm:$0xff] %v530
          %784 = vst [vmem:[#allocation2 + $0x90] sm:$0xff] %v534
          %785 = vst [vmem:[#allocation2 + $0x98] sm:$0xff] %v536
          %786 = vst [vmem:[#allocation2 + $0xa0] sm:$0xff] %v540
          %787 = vst [vmem:[#allocation2 + $0xa8] sm:$0xff] %v542
          %788 = vst [vmem:[#allocation2 + $0xb0] sm:$0xff] %v546
          %789 = vst [vmem:[#allocation2 + $0xb8] sm:$0xff] %v548
          %790 = vst [vmem:[#allocation2 + $0xc0] sm:$0xff] %v552
          %791 = vst [vmem:[#allocation2 + $0xc8] sm:$0xff] %v554
          %792 = vst [vmem:[#allocation2 + $0xd0] sm:$0xff] %v558
          %793 = vst [vmem:[#allocation2 + $0xd8] sm:$0xff] %v560
          %794 = vst [vmem:[#allocation2 + $0xe0] sm:$0xff] %v564
          %795 = vst [vmem:[#allocation2 + $0xe8] sm:$0xff] %v566
          %796 = vst [vmem:[#allocation2 + $0xf0] sm:$0xff] %v570
          %797 = vst [vmem:[#allocation2 + $0xf8] sm:$0xff] %v572
          %798 = vst [vmem:[#allocation2 + $0x100] sm:$0xff] %v576
          %799 = vst [vmem:[#allocation2 + $0x108] sm:$0xff] %v578
          %800 = vst [vmem:[#allocation2 + $0x110] sm:$0xff] %v582
          %801 = vst [vmem:[#allocation2 + $0x118] sm:$0xff] %v584
          %802 = vst [vmem:[#allocation2 + $0x120] sm:$0xff] %v588
          %803 = vst [vmem:[#allocation2 + $0x128] sm:$0xff] %v590
          %804 = vst [vmem:[#allocation2 + $0x130] sm:$0xff] %v594
          %805 = vst [vmem:[#allocation2 + $0x138] sm:$0xff] %v596
          %806 = vst [vmem:[#allocation2 + $0x140] sm:$0xff] %v600
          %807 = vst [vmem:[#allocation2 + $0x148] sm:$0xff] %v602
          %808 = vst [vmem:[#allocation2 + $0x150] sm:$0xff] %v606
          %809 = vst [vmem:[#allocation2 + $0x158] sm:$0xff] %v608
          %810 = vst [vmem:[#allocation2 + $0x160] sm:$0xff] %v612
          %811 = vst [vmem:[#allocation2 + $0x168] sm:$0xff] %v614
          %812 = vst [vmem:[#allocation2 + $0x170] sm:$0xff] %v618
          %813 = vst [vmem:[#allocation2 + $0x178] sm:$0xff] %v620
          %814 = vst [vmem:[#allocation2 + $0x180] sm:$0xff] %v624
          %815 = vst [vmem:[#allocation2 + $0x188] sm:$0xff] %v626
          %816 = vst [vmem:[#allocation2 + $0x190] sm:$0xff] %v630
          %817 = vst [vmem:[#allocation2 + $0x198] sm:$0xff] %v632
          %818 = vst [vmem:[#allocation2 + $0x1a0] sm:$0xff] %v636
          %819 = vst [vmem:[#allocation2 + $0x1a8] sm:$0xff] %v638
          %820 = vst [vmem:[#allocation2 + $0x1b0] sm:$0xff] %v642
          %821 = vst [vmem:[#allocation2 + $0x1b8] sm:$0xff] %v644
          %822 = vst [vmem:[#allocation2 + $0x1c0] sm:$0xff] %v648
          %823 = vst [vmem:[#allocation2 + $0x1c8] sm:$0xff] %v650
          %824 = vst [vmem:[#allocation2 + $0x1d0] sm:$0xff] %v654
          %825 = vst [vmem:[#allocation2 + $0x1d8] sm:$0xff] %v656
          %826 = vst [vmem:[#allocation2 + $0x1e0] sm:$0xff] %v660
          %827 = vst [vmem:[#allocation2 + $0x1e8] sm:$0xff] %v662
          %828 = vst [vmem:[#allocation2 + $0x1f0] sm:$0xff] %v666
          %829 = vst [vmem:[#allocation2 + $0x1f8] sm:$0xff] %v668
          %830 = vst [vmem:[#allocation2 + $0x200] sm:$0xff] %v672
          %831 = vst [vmem:[#allocation2 + $0x208] sm:$0xff] %v674
          %832 = vst [vmem:[#allocation2 + $0x210] sm:$0xff] %v678
          %833 = vst [vmem:[#allocation2 + $0x218] sm:$0xff] %v680
          %834 = vst [vmem:[#allocation2 + $0x220] sm:$0xff] %v684
          %835 = vst [vmem:[#allocation2 + $0x228] sm:$0xff] %v686
          %836 = vst [vmem:[#allocation2 + $0x230] sm:$0xff] %v690
          %837 = vst [vmem:[#allocation2 + $0x238] sm:$0xff] %v692
          %838 = vst [vmem:[#allocation2 + $0x240] sm:$0xff] %v696
          %839 = vst [vmem:[#allocation2 + $0x248] sm:$0xff] %v698
          %840 = vst [vmem:[#allocation2 + $0x250] sm:$0xff] %v702
          %841 = vst [vmem:[#allocation2 + $0x258] sm:$0xff] %v704
          %842 = vst [vmem:[#allocation2 + $0x260] sm:$0xff] %v708
          %843 = vst [vmem:[#allocation2 + $0x268] sm:$0xff] %v710
          %844 = vst [vmem:[#allocation2 + $0x270] sm:$0xff] %v714
          %845 = vst [vmem:[#allocation2 + $0x278] sm:$0xff] %v716
          %846 = vst [vmem:[#allocation2 + $0x280] sm:$0xff] %v720
          %847 = vst [vmem:[#allocation2 + $0x288] sm:$0xff] %v722
          %848 = vst [vmem:[#allocation2 + $0x290] sm:$0xff] %v726
          %849 = vst [vmem:[#allocation2 + $0x298] sm:$0xff] %v728
          %850 = vst [vmem:[#allocation2 + $0x2a0] sm:$0xff] %v732
          %851 = vst [vmem:[#allocation2 + $0x2a8] sm:$0xff] %v734
          %852 = vst [vmem:[#allocation2 + $0x2b0] sm:$0xff] %v738
          %853 = vst [vmem:[#allocation2 + $0x2b8] sm:$0xff] %v740
          %854 = vst [vmem:[#allocation2 + $0x2c0] sm:$0xff] %v744
          %855 = vst [vmem:[#allocation2 + $0x2c8] sm:$0xff] %v746
          %856 = vst [vmem:[#allocation2 + $0x2d0] sm:$0xff] %v750
          %857 = vst [vmem:[#allocation2 + $0x2d8] sm:$0xff] %v752
          %858 = vst [vmem:[#allocation2 + $0x2e0] sm:$0xff] %v756
          %859 = vst [vmem:[#allocation2 + $0x2e8] sm:$0xff] %v758
          %860 = vst [vmem:[#allocation2 + $0x2f0] sm:$0xff] %v762
          %861 = vst [vmem:[#allocation2 + $0x2f8] sm:$0xff] %v764
        $region40: #{tpu_custom_call.1} parent=35 // pred_fallthru
          _
        %s862 = smul.u32 %s23, 32
        %s863 = sadd.s32 %s862, 128
        %s864 = sadd.s32 %s862, 256
        %s865 = sshra.s32 %s862, 3
        %s866 = sand.u32 %s862, 7
        %s867 = smul.u32 %s865, 2
        %s868 = smul.addr %s867, 8
        %s869 = scalar_lea.vmem [#allocation2], %s868
        %v870 = vld [vmem:[%s869] sm:$0xff]
        %v871 = vld [vmem:[%s869 + $0x8] sm:$0xff]
        %v872 = vld [vmem:[%s869 + $0x10] sm:$0xff]
        %v873 = vld [vmem:[%s869 + $0x18] sm:$0xff]
        %v874 = vld [vmem:[%s869 + $0x20] sm:$0xff]
        %v875 = vld [vmem:[%s869 + $0x28] sm:$0xff]
        %v876 = vld [vmem:[%s869 + $0x30] sm:$0xff]
        %v877 = vld [vmem:[%s869 + $0x38] sm:$0xff]
        %s878 = sshra.s32 %s863, 3
        %s879 = sand.u32 %s863, 7
        %s880 = smul.u32 %s878, 2
        %s881 = smul.addr %s880, 8
        %s882 = scalar_lea.vmem [#allocation2], %s881
        %v883 = vld [vmem:[%s882] sm:$0xff]
        %v884 = vld [vmem:[%s882 + $0x8] sm:$0xff]
        %v885 = vld [vmem:[%s882 + $0x10] sm:$0xff]
        %v886 = vld [vmem:[%s882 + $0x18] sm:$0xff]
        %v887 = vld [vmem:[%s882 + $0x20] sm:$0xff]
        %v888 = vld [vmem:[%s882 + $0x28] sm:$0xff]
        %v889 = vld [vmem:[%s882 + $0x30] sm:$0xff]
        %v890 = vld [vmem:[%s882 + $0x38] sm:$0xff]
        %s891 = sshra.s32 %s864, 3
        %s892 = sand.u32 %s864, 7
        %s893 = smul.u32 %s891, 2
        %s894 = smul.addr %s893, 8
        %s895 = scalar_lea.vmem [#allocation2], %s894
        %v896 = vld [vmem:[%s895] sm:$0xff]
        %v897 = vld [vmem:[%s895 + $0x8] sm:$0xff]
        %v898 = vld [vmem:[%s895 + $0x10] sm:$0xff]
        %v899 = vld [vmem:[%s895 + $0x18] sm:$0xff]
        %v900 = vld [vmem:[%s895 + $0x20] sm:$0xff]
        %v901 = vld [vmem:[%s895 + $0x28] sm:$0xff]
        %v902 = vld [vmem:[%s895 + $0x30] sm:$0xff]
        %v903 = vld [vmem:[%s895 + $0x38] sm:$0xff]
        %904 = vxpose.xlu0.b32.start [1/16] %v883, 128
        %905 = vxpose.xlu0.b32.cont [2/16] %v885, 128
        %906 = vxpose.xlu0.b32.cont [3/16] %v887, 128
        %907 = vxpose.xlu0.b32.cont [4/16] %v889, 128
        %908 = vxpose.xlu0.b32.cont [5/16] 0.0, 128
        %909 = vxpose.xlu0.b32.cont [6/16] 0.0, 128
        %910 = vxpose.xlu0.b32.cont [7/16] 0.0, 128
        %911 = vxpose.xlu0.b32.cont [8/16] 0.0, 128
        %912 = vxpose.xlu0.b32.cont [9/16] 0.0, 128
        %913 = vxpose.xlu0.b32.cont [10/16] 0.0, 128
        %914 = vxpose.xlu0.b32.cont [11/16] 0.0, 128
        %915 = vxpose.xlu0.b32.cont [12/16] 0.0, 128
        %916 = vxpose.xlu0.b32.cont [13/16] 0.0, 128
        %917 = vxpose.xlu0.b32.cont [14/16] 0.0, 128
        %918 = vxpose.xlu0.b32.cont [15/16] 0.0, 128
        %919 = vxpose.xlu0.b32.end [16/16] 0.0, 128
        %v920 = vpop.trf.xlu0
        %v921 = vpop.trf.xlu0
        %v922 = vpop.trf.xlu0
        %v923 = vpop.trf.xlu0
        %v924 = vpop.trf.xlu0
        %v925 = vpop.trf.xlu0
        %v926 = vpop.trf.xlu0
        %v927 = vpop.trf.xlu0
        %v928 = vpop.trf.xlu0
        %v929 = vpop.trf.xlu0
        %v930 = vpop.trf.xlu0
        %v931 = vpop.trf.xlu0
        %v932 = vpop.trf.xlu0
        %v933 = vpop.trf.xlu0
        %v934 = vpop.trf.xlu0
        %v935 = vpop.trf.xlu0
        %936 = vxpose.xlu0.b32.start [1/16] %v884, 128
        %937 = vxpose.xlu0.b32.cont [2/16] %v886, 128
        %938 = vxpose.xlu0.b32.cont [3/16] %v888, 128
        %939 = vxpose.xlu0.b32.cont [4/16] %v890, 128
        %940 = vxpose.xlu0.b32.cont [5/16] 0.0, 128
        %941 = vxpose.xlu0.b32.cont [6/16] 0.0, 128
        %942 = vxpose.xlu0.b32.cont [7/16] 0.0, 128
        %943 = vxpose.xlu0.b32.cont [8/16] 0.0, 128
        %944 = vxpose.xlu0.b32.cont [9/16] 0.0, 128
        %945 = vxpose.xlu0.b32.cont [10/16] 0.0, 128
        %946 = vxpose.xlu0.b32.cont [11/16] 0.0, 128
        %947 = vxpose.xlu0.b32.cont [12/16] 0.0, 128
        %948 = vxpose.xlu0.b32.cont [13/16] 0.0, 128
        %949 = vxpose.xlu0.b32.cont [14/16] 0.0, 128
        %950 = vxpose.xlu0.b32.cont [15/16] 0.0, 128
        %951 = vxpose.xlu0.b32.end [16/16] 0.0, 128
        %v952 = vpop.trf.xlu0
        %v953 = vpop.trf.xlu0
        %v954 = vpop.trf.xlu0
        %v955 = vpop.trf.xlu0
        %v956 = vpop.trf.xlu0
        %v957 = vpop.trf.xlu0
        %v958 = vpop.trf.xlu0
        %v959 = vpop.trf.xlu0
        %v960 = vpop.trf.xlu0
        %v961 = vpop.trf.xlu0
        %v962 = vpop.trf.xlu0
        %v963 = vpop.trf.xlu0
        %v964 = vpop.trf.xlu0
        %v965 = vpop.trf.xlu0
        %v966 = vpop.trf.xlu0
        %v967 = vpop.trf.xlu0
        %vm968 = vcmask 261120
        %v970 = vsel %vm968, %v920, 0
        %v973 = vsel %vm968, %v921, 0
        %v976 = vsel %vm968, %v922, 0
        %v979 = vsel %vm968, %v923, 0
        %v982 = vsel %vm968, %v924, 0
        %v985 = vsel %vm968, %v925, 0
        %v988 = vsel %vm968, %v926, 0
        %v991 = vsel %vm968, %v927, 0
        %v994 = vsel %vm968, %v928, 0
        %v997 = vsel %vm968, %v929, 0
        %v1000 = vsel %vm968, %v930, 0
        %v1003 = vsel %vm968, %v931, 0
        %v1006 = vsel %vm968, %v932, 0
        %v1009 = vsel %vm968, %v933, 0
        %v1012 = vsel %vm968, %v934, 0
        %v1015 = vsel %vm968, %v935, 0
        %v1018 = vsel %vm968, %v952, 0
        %v1021 = vsel %vm968, %v953, 0
        %v1024 = vsel %vm968, %v954, 0
        %v1027 = vsel %vm968, %v955, 0
        %v1030 = vsel %vm968, %v956, 0
        %v1033 = vsel %vm968, %v957, 0
        %v1036 = vsel %vm968, %v958, 0
        %v1039 = vsel %vm968, %v959, 0
        %v1042 = vsel %vm968, %v960, 0
        %v1045 = vsel %vm968, %v961, 0
        %v1048 = vsel %vm968, %v962, 0
        %v1051 = vsel %vm968, %v963, 0
        %v1054 = vsel %vm968, %v964, 0
        %v1057 = vsel %vm968, %v965, 0
        %v1060 = vsel %vm968, %v966, 0
        %v1063 = vsel %vm968, %v967, 0
        %1065 = vmatprep.subr.mxu0 0.0
        %1066 = vmatpush1.msra.mxu0 0.0
        %1067 = vmatprep.subr.mxu0 0.0
        %1068 = vmatpush1.msra.mxu0 0.0
        %1069 = vmatprep.subr.mxu0 0.0
        %1070 = vmatpush1.msra.mxu0 0.0
        %1071 = vmatprep.subr.mxu0 0.0
        %1072 = vmatpush1.msra.mxu0 0.0
        %1073 = vmatprep.subr.mxu0 0.0
        %1074 = vmatpush1.msra.mxu0 0.0
        %1075 = vmatprep.subr.mxu0 0.0
        %1076 = vmatpush1.msra.mxu0 0.0
        %1077 = vmatprep.subr.mxu0 0.0
        %1078 = vmatpush1.msra.mxu0 0.0
        %1079 = vmatprep.subr.mxu0 0.0
        %1080 = vmatpush1.msra.mxu0 0.0
        %1081 = vmatprep.subr.mxu0 0.0
        %1082 = vmatpush1.msra.mxu0 0.0
        %1083 = vmatprep.subr.mxu0 0.0
        %1084 = vmatpush1.msra.mxu0 0.0
        %1085 = vmatprep.subr.mxu0 0.0
        %1086 = vmatpush1.msra.mxu0 0.0
        %1087 = vmatprep.subr.mxu0 0.0
        %1088 = vmatpush1.msra.mxu0 0.0
        %1089 = vmatprep.subr.mxu0 %v877
        %1090 = vmatpush1.msra.mxu0 %v876
        %1091 = vmatprep.subr.mxu0 %v875
        %1092 = vmatpush1.msra.mxu0 %v874
        %1093 = vmatprep.subr.mxu0 %v873
        %1094 = vmatpush1.msra.mxu0 %v872
        %1095 = vmatprep.subr.mxu0 %v871
        %1096 = vmatpush1.msra.mxu0 %v870
        %1097 = vmatprep.subr.mxu0 0.0
        %1098 = vmatpush2.msra.mxu0 0.0
        %1099 = vmatprep.subr.mxu0 0.0
        %1100 = vmatpush2.msra.mxu0 0.0
        %1101 = vmatprep.subr.mxu0 0.0
        %1102 = vmatpush2.msra.mxu0 0.0
        %1103 = vmatprep.subr.mxu0 0.0
        %1104 = vmatpush2.msra.mxu0 0.0
        %1105 = vmatprep.subr.mxu0 0.0
        %1106 = vmatpush2.msra.mxu0 0.0
        %1107 = vmatprep.subr.mxu0 0.0
        %1108 = vmatpush2.msra.mxu0 0.0
        %1109 = vmatprep.subr.mxu0 0.0
        %1110 = vmatpush2.msra.mxu0 0.0
        %1111 = vmatprep.subr.mxu0 0.0
        %1112 = vmatpush2.msra.mxu0 0.0
        %1113 = vmatprep.subr.mxu0 0.0
        %1114 = vmatpush2.msra.mxu0 0.0
        %1115 = vmatprep.subr.mxu0 0.0
        %1116 = vmatpush2.msra.mxu0 0.0
        %1117 = vmatprep.subr.mxu0 0.0
        %1118 = vmatpush2.msra.mxu0 0.0
        %1119 = vmatprep.subr.mxu0 0.0
        %1120 = vmatpush2.msra.mxu0 0.0
        %1121 = vmatprep.subr.mxu0 0.0
        %1122 = vmatpush2.msra.mxu0 0.0
        %1123 = vmatprep.subr.mxu0 0.0
        %1124 = vmatpush2.msra.mxu0 0.0
        %1125 = vmatprep.subr.mxu0 0.0
        %1126 = vmatpush2.msra.mxu0 0.0
        %1127 = vmatprep.subr.mxu0 0.0
        %1128 = vmatpush2.msra.mxu0 0.0
        %1129 = vmatprep.mubr.f32.mxu0 0.0
        %1130 = vmatmul.mubr.f32.gmra.mxu0 %v970
        %v1131 = vpop.f32.mrf.mxu0
        %v1132 = vadd.f32 0.0, %v1131
        %v1133 = vpop.f32.mrf.mxu0
        %v1134 = vadd.f32 0.0, %v1133
        %1135 = vmatprep.mubr.f32.mxu0 0.0
        %1136 = vmatmul.mubr.f32.gmra.mxu0 %v973
        %v1137 = vpop.f32.mrf.mxu0
        %v1138 = vadd.f32 0.0, %v1137
        %v1139 = vpop.f32.mrf.mxu0
        %v1140 = vadd.f32 0.0, %v1139
        %1141 = vmatprep.mubr.f32.mxu0 0.0
        %1142 = vmatmul.mubr.f32.gmra.mxu0 %v976
        %v1143 = vpop.f32.mrf.mxu0
        %v1144 = vadd.f32 0.0, %v1143
        %v1145 = vpop.f32.mrf.mxu0
        %v1146 = vadd.f32 0.0, %v1145
        %1147 = vmatprep.mubr.f32.mxu0 0.0
        %1148 = vmatmul.mubr.f32.gmra.mxu0 %v979
        %v1149 = vpop.f32.mrf.mxu0
        %v1150 = vadd.f32 0.0, %v1149
        %v1151 = vpop.f32.mrf.mxu0
        %v1152 = vadd.f32 0.0, %v1151
        %1153 = vmatprep.mubr.f32.mxu0 0.0
        %1154 = vmatmul.mubr.f32.gmra.mxu0 %v982
        %v1155 = vpop.f32.mrf.mxu0
        %v1156 = vadd.f32 0.0, %v1155
        %v1157 = vpop.f32.mrf.mxu0
        %v1158 = vadd.f32 0.0, %v1157
        %1159 = vmatprep.mubr.f32.mxu0 0.0
        %1160 = vmatmul.mubr.f32.gmra.mxu0 %v985
        %v1161 = vpop.f32.mrf.mxu0
        %v1162 = vadd.f32 0.0, %v1161
        %v1163 = vpop.f32.mrf.mxu0
        %v1164 = vadd.f32 0.0, %v1163
        %1165 = vmatprep.mubr.f32.mxu0 0.0
        %1166 = vmatmul.mubr.f32.gmra.mxu0 %v988
        %v1167 = vpop.f32.mrf.mxu0
        %v1168 = vadd.f32 0.0, %v1167
        %v1169 = vpop.f32.mrf.mxu0
        %v1170 = vadd.f32 0.0, %v1169
        %1171 = vmatprep.mubr.f32.mxu0 0.0
        %1172 = vmatmul.mubr.f32.gmra.mxu0 %v991
        %v1173 = vpop.f32.mrf.mxu0
        %v1174 = vadd.f32 0.0, %v1173
        %v1175 = vpop.f32.mrf.mxu0
        %v1176 = vadd.f32 0.0, %v1175
        %1177 = vmatprep.mubr.f32.mxu0 0.0
        %1178 = vmatmul.mubr.f32.gmra.mxu0 %v994
        %v1179 = vpop.f32.mrf.mxu0
        %v1180 = vadd.f32 0.0, %v1179
        %v1181 = vpop.f32.mrf.mxu0
        %v1182 = vadd.f32 0.0, %v1181
        %1183 = vmatprep.mubr.f32.mxu0 0.0
        %1184 = vmatmul.mubr.f32.gmra.mxu0 %v997
        %v1185 = vpop.f32.mrf.mxu0
        %v1186 = vadd.f32 0.0, %v1185
        %v1187 = vpop.f32.mrf.mxu0
        %v1188 = vadd.f32 0.0, %v1187
        %1189 = vmatprep.mubr.f32.mxu0 0.0
        %1190 = vmatmul.mubr.f32.gmra.mxu0 %v1000
        %v1191 = vpop.f32.mrf.mxu0
        %v1192 = vadd.f32 0.0, %v1191
        %v1193 = vpop.f32.mrf.mxu0
        %v1194 = vadd.f32 0.0, %v1193
        %1195 = vmatprep.mubr.f32.mxu0 0.0
        %1196 = vmatmul.mubr.f32.gmra.mxu0 %v1003
        %v1197 = vpop.f32.mrf.mxu0
        %v1198 = vadd.f32 0.0, %v1197
        %v1199 = vpop.f32.mrf.mxu0
        %v1200 = vadd.f32 0.0, %v1199
        %1201 = vmatprep.mubr.f32.mxu0 0.0
        %1202 = vmatmul.mubr.f32.gmra.mxu0 %v1006
        %v1203 = vpop.f32.mrf.mxu0
        %v1204 = vadd.f32 0.0, %v1203
        %v1205 = vpop.f32.mrf.mxu0
        %v1206 = vadd.f32 0.0, %v1205
        %1207 = vmatprep.mubr.f32.mxu0 0.0
        %1208 = vmatmul.mubr.f32.gmra.mxu0 %v1009
        %v1209 = vpop.f32.mrf.mxu0
        %v1210 = vadd.f32 0.0, %v1209
        %v1211 = vpop.f32.mrf.mxu0
        %v1212 = vadd.f32 0.0, %v1211
        %1213 = vmatprep.mubr.f32.mxu0 0.0
        %1214 = vmatmul.mubr.f32.gmra.mxu0 %v1012
        %v1215 = vpop.f32.mrf.mxu0
        %v1216 = vadd.f32 0.0, %v1215
        %v1217 = vpop.f32.mrf.mxu0
        %v1218 = vadd.f32 0.0, %v1217
        %1219 = vmatprep.mubr.f32.mxu0 0.0
        %1220 = vmatmul.mubr.f32.gmra.mxu0 %v1015
        %v1221 = vpop.f32.mrf.mxu0
        %v1222 = vadd.f32 0.0, %v1221
        %v1223 = vpop.f32.mrf.mxu0
        %v1224 = vadd.f32 0.0, %v1223
        %1225 = vmatprep.mubr.f32.mxu0 0.0
        %1226 = vmatmul.mubr.f32.gmra.mxu0 %v1018
        %v1227 = vpop.f32.mrf.mxu0
        %v1228 = vadd.f32 0.0, %v1227
        %v1229 = vpop.f32.mrf.mxu0
        %v1230 = vadd.f32 0.0, %v1229
        %1231 = vmatprep.mubr.f32.mxu0 0.0
        %1232 = vmatmul.mubr.f32.gmra.mxu0 %v1021
        %v1233 = vpop.f32.mrf.mxu0
        %v1234 = vadd.f32 0.0, %v1233
        %v1235 = vpop.f32.mrf.mxu0
        %v1236 = vadd.f32 0.0, %v1235
        %1237 = vmatprep.mubr.f32.mxu0 0.0
        %1238 = vmatmul.mubr.f32.gmra.mxu0 %v1024
        %v1239 = vpop.f32.mrf.mxu0
        %v1240 = vadd.f32 0.0, %v1239
        %v1241 = vpop.f32.mrf.mxu0
        %v1242 = vadd.f32 0.0, %v1241
        %1243 = vmatprep.mubr.f32.mxu0 0.0
        %1244 = vmatmul.mubr.f32.gmra.mxu0 %v1027
        %v1245 = vpop.f32.mrf.mxu0
        %v1246 = vadd.f32 0.0, %v1245
        %v1247 = vpop.f32.mrf.mxu0
        %v1248 = vadd.f32 0.0, %v1247
        %1249 = vmatprep.mubr.f32.mxu0 0.0
        %1250 = vmatmul.mubr.f32.gmra.mxu0 %v1030
        %v1251 = vpop.f32.mrf.mxu0
        %v1252 = vadd.f32 0.0, %v1251
        %v1253 = vpop.f32.mrf.mxu0
        %v1254 = vadd.f32 0.0, %v1253
        %1255 = vmatprep.mubr.f32.mxu0 0.0
        %1256 = vmatmul.mubr.f32.gmra.mxu0 %v1033
        %v1257 = vpop.f32.mrf.mxu0
        %v1258 = vadd.f32 0.0, %v1257
        %v1259 = vpop.f32.mrf.mxu0
        %v1260 = vadd.f32 0.0, %v1259
        %1261 = vmatprep.mubr.f32.mxu0 0.0
        %1262 = vmatmul.mubr.f32.gmra.mxu0 %v1036
        %v1263 = vpop.f32.mrf.mxu0
        %v1264 = vadd.f32 0.0, %v1263
        %v1265 = vpop.f32.mrf.mxu0
        %v1266 = vadd.f32 0.0, %v1265
        %1267 = vmatprep.mubr.f32.mxu0 0.0
        %1268 = vmatmul.mubr.f32.gmra.mxu0 %v1039
        %v1269 = vpop.f32.mrf.mxu0
        %v1270 = vadd.f32 0.0, %v1269
        %v1271 = vpop.f32.mrf.mxu0
        %v1272 = vadd.f32 0.0, %v1271
        %1273 = vmatprep.mubr.f32.mxu0 0.0
        %1274 = vmatmul.mubr.f32.gmra.mxu0 %v1042
        %v1275 = vpop.f32.mrf.mxu0
        %v1276 = vadd.f32 0.0, %v1275
        %v1277 = vpop.f32.mrf.mxu0
        %v1278 = vadd.f32 0.0, %v1277
        %1279 = vmatprep.mubr.f32.mxu0 0.0
        %1280 = vmatmul.mubr.f32.gmra.mxu0 %v1045
        %v1281 = vpop.f32.mrf.mxu0
        %v1282 = vadd.f32 0.0, %v1281
        %v1283 = vpop.f32.mrf.mxu0
        %v1284 = vadd.f32 0.0, %v1283
        %1285 = vmatprep.mubr.f32.mxu0 0.0
        %1286 = vmatmul.mubr.f32.gmra.mxu0 %v1048
        %v1287 = vpop.f32.mrf.mxu0
        %v1288 = vadd.f32 0.0, %v1287
        %v1289 = vpop.f32.mrf.mxu0
        %v1290 = vadd.f32 0.0, %v1289
        %1291 = vmatprep.mubr.f32.mxu0 0.0
        %1292 = vmatmul.mubr.f32.gmra.mxu0 %v1051
        %v1293 = vpop.f32.mrf.mxu0
        %v1294 = vadd.f32 0.0, %v1293
        %v1295 = vpop.f32.mrf.mxu0
        %v1296 = vadd.f32 0.0, %v1295
        %1297 = vmatprep.mubr.f32.mxu0 0.0
        %1298 = vmatmul.mubr.f32.gmra.mxu0 %v1054
        %v1299 = vpop.f32.mrf.mxu0
        %v1300 = vadd.f32 0.0, %v1299
        %v1301 = vpop.f32.mrf.mxu0
        %v1302 = vadd.f32 0.0, %v1301
        %1303 = vmatprep.mubr.f32.mxu0 0.0
        %1304 = vmatmul.mubr.f32.gmra.mxu0 %v1057
        %v1305 = vpop.f32.mrf.mxu0
        %v1306 = vadd.f32 0.0, %v1305
        %v1307 = vpop.f32.mrf.mxu0
        %v1308 = vadd.f32 0.0, %v1307
        %1309 = vmatprep.mubr.f32.mxu0 0.0
        %1310 = vmatmul.mubr.f32.gmra.mxu0 %v1060
        %v1311 = vpop.f32.mrf.mxu0
        %v1312 = vadd.f32 0.0, %v1311
        %v1313 = vpop.f32.mrf.mxu0
        %v1314 = vadd.f32 0.0, %v1313
        %1315 = vmatprep.mubr.f32.mxu0 0.0
        %1316 = vmatmul.mubr.f32.gmra.mxu0 %v1063
        %v1317 = vpop.f32.mrf.mxu0
        %v1318 = vadd.f32 0.0, %v1317
        %v1319 = vpop.f32.mrf.mxu0
        %v1320 = vadd.f32 0.0, %v1319
        %1321 = vdwg.mxu0
        %v1322 = vmax.f32 %v1132, %v1144
        %v1323 = vmax.f32 %v1138, %v1150
        %v1324 = vmax.f32 %v1322, %v1156
        %v1325 = vmax.f32 %v1323, %v1162
        %v1326 = vmax.f32 %v1324, %v1168
        %v1327 = vmax.f32 %v1325, %v1174
        %v1328 = vmax.f32 %v1326, %v1180
        %v1329 = vmax.f32 %v1327, %v1186
        %v1330 = vmax.f32 %v1328, %v1192
        %v1331 = vmax.f32 %v1329, %v1198
        %v1332 = vmax.f32 %v1330, %v1204
        %v1333 = vmax.f32 %v1331, %v1210
        %v1334 = vmax.f32 %v1332, %v1216
        %v1335 = vmax.f32 %v1333, %v1222
        %v1336 = vmax.f32 %v1334, %v1228
        %v1337 = vmax.f32 %v1335, %v1234
        %v1338 = vmax.f32 %v1336, %v1240
        %v1339 = vmax.f32 %v1337, %v1246
        %v1340 = vmax.f32 %v1338, %v1252
        %v1341 = vmax.f32 %v1339, %v1258
        %v1342 = vmax.f32 %v1340, %v1264
        %v1343 = vmax.f32 %v1341, %v1270
        %v1344 = vmax.f32 %v1342, %v1276
        %v1345 = vmax.f32 %v1343, %v1282
        %v1346 = vmax.f32 %v1344, %v1288
        %v1347 = vmax.f32 %v1345, %v1294
        %v1348 = vmax.f32 %v1346, %v1300
        %v1349 = vmax.f32 %v1347, %v1306
        %v1350 = vmax.f32 %v1348, %v1312
        %v1351 = vmax.f32 %v1349, %v1318
        %v1352 = vmax.f32 %v1350, %v1351
        %v1353 = vrot.slane %v1352, 4
        %v1354 = vmax.f32 %v1352, %v1353
        %v1355 = vrot.slane %v1354, 2
        %v1356 = vmax.f32 %v1354, %v1355
        %v1357 = vrot.slane %v1356, 1
        %v1358 = vmax.f32 %v1356, %v1357
        %v1359 = vmax.f32 %v1134, %v1146
        %v1360 = vmax.f32 %v1140, %v1152
        %v1361 = vmax.f32 %v1359, %v1158
        %v1362 = vmax.f32 %v1360, %v1164
        %v1363 = vmax.f32 %v1361, %v1170
        %v1364 = vmax.f32 %v1362, %v1176
        %v1365 = vmax.f32 %v1363, %v1182
        %v1366 = vmax.f32 %v1364, %v1188
        %v1367 = vmax.f32 %v1365, %v1194
        %v1368 = vmax.f32 %v1366, %v1200
        %v1369 = vmax.f32 %v1367, %v1206
        %v1370 = vmax.f32 %v1368, %v1212
        %v1371 = vmax.f32 %v1369, %v1218
        %v1372 = vmax.f32 %v1370, %v1224
        %v1373 = vmax.f32 %v1371, %v1230
        %v1374 = vmax.f32 %v1372, %v1236
        %v1375 = vmax.f32 %v1373, %v1242
        %v1376 = vmax.f32 %v1374, %v1248
        %v1377 = vmax.f32 %v1375, %v1254
        %v1378 = vmax.f32 %v1376, %v1260
        %v1379 = vmax.f32 %v1377, %v1266
        %v1380 = vmax.f32 %v1378, %v1272
        %v1381 = vmax.f32 %v1379, %v1278
        %v1382 = vmax.f32 %v1380, %v1284
        %v1383 = vmax.f32 %v1381, %v1290
        %v1384 = vmax.f32 %v1382, %v1296
        %v1385 = vmax.f32 %v1383, %v1302
        %v1386 = vmax.f32 %v1384, %v1308
        %v1387 = vmax.f32 %v1385, %v1314
        %v1388 = vmax.f32 %v1386, %v1320
        %v1389 = vmax.f32 %v1387, %v1388
        %v1390 = vrot.slane %v1389, 4
        %v1391 = vmax.f32 %v1389, %v1390
        %v1392 = vrot.slane %v1391, 2
        %v1393 = vmax.f32 %v1391, %v1392
        %v1394 = vrot.slane %v1393, 1
        %v1395 = vmax.f32 %v1393, %v1394
        %v1396 = vsub.f32 %v1132, %v1358
        %v1397 = vsub.f32 %v1134, %v1395
        %v1398 = vsub.f32 %v1138, %v1358
        %v1399 = vsub.f32 %v1140, %v1395
        %v1400 = vsub.f32 %v1144, %v1358
        %v1401 = vsub.f32 %v1146, %v1395
        %v1402 = vsub.f32 %v1150, %v1358
        %v1403 = vsub.f32 %v1152, %v1395
        %v1404 = vsub.f32 %v1156, %v1358
        %v1405 = vsub.f32 %v1158, %v1395
        %v1406 = vsub.f32 %v1162, %v1358
        %v1407 = vsub.f32 %v1164, %v1395
        %v1408 = vsub.f32 %v1168, %v1358
        %v1409 = vsub.f32 %v1170, %v1395
        %v1410 = vsub.f32 %v1174, %v1358
        %v1411 = vsub.f32 %v1176, %v1395
        %v1412 = vsub.f32 %v1180, %v1358
        %v1413 = vsub.f32 %v1182, %v1395
        %v1414 = vsub.f32 %v1186, %v1358
        %v1415 = vsub.f32 %v1188, %v1395
        %v1416 = vsub.f32 %v1192, %v1358
        %v1417 = vsub.f32 %v1194, %v1395
        %v1418 = vsub.f32 %v1198, %v1358
        %v1419 = vsub.f32 %v1200, %v1395
        %v1420 = vsub.f32 %v1204, %v1358
        %v1421 = vsub.f32 %v1206, %v1395
        %v1422 = vsub.f32 %v1210, %v1358
        %v1423 = vsub.f32 %v1212, %v1395
        %v1424 = vsub.f32 %v1216, %v1358
        %v1425 = vsub.f32 %v1218, %v1395
        %v1426 = vsub.f32 %v1222, %v1358
        %v1427 = vsub.f32 %v1224, %v1395
        %v1428 = vsub.f32 %v1228, %v1358
        %v1429 = vsub.f32 %v1230, %v1395
        %v1430 = vsub.f32 %v1234, %v1358
        %v1431 = vsub.f32 %v1236, %v1395
        %v1432 = vsub.f32 %v1240, %v1358
        %v1433 = vsub.f32 %v1242, %v1395
        %v1434 = vsub.f32 %v1246, %v1358
        %v1435 = vsub.f32 %v1248, %v1395
        %v1436 = vsub.f32 %v1252, %v1358
        %v1437 = vsub.f32 %v1254, %v1395
        %v1438 = vsub.f32 %v1258, %v1358
        %v1439 = vsub.f32 %v1260, %v1395
        %v1440 = vsub.f32 %v1264, %v1358
        %v1441 = vsub.f32 %v1266, %v1395
        %v1442 = vsub.f32 %v1270, %v1358
        %v1443 = vsub.f32 %v1272, %v1395
        %v1444 = vsub.f32 %v1276, %v1358
        %v1445 = vsub.f32 %v1278, %v1395
        %v1446 = vsub.f32 %v1282, %v1358
        %v1447 = vsub.f32 %v1284, %v1395
        %v1448 = vsub.f32 %v1288, %v1358
        %v1449 = vsub.f32 %v1290, %v1395
        %v1450 = vsub.f32 %v1294, %v1358
        %v1451 = vsub.f32 %v1296, %v1395
        %v1452 = vsub.f32 %v1300, %v1358
        %v1453 = vsub.f32 %v1302, %v1395
        %v1454 = vsub.f32 %v1306, %v1358
        %v1455 = vsub.f32 %v1308, %v1395
        %v1456 = vsub.f32 %v1312, %v1358
        %v1457 = vsub.f32 %v1314, %v1395
        %v1458 = vsub.f32 %v1318, %v1358
        %v1459 = vsub.f32 %v1320, %v1395
        %v1460 = vmul.f32 %v1396, 1.442695
        %v1461 = vpow.pop %v1460
        %v1462 = vmul.f32 %v1397, 1.442695
        %v1463 = vpow.pop %v1462
        %v1464 = vmul.f32 %v1398, 1.442695
        %v1465 = vpow.pop %v1464
        %v1466 = vmul.f32 %v1399, 1.442695
        %v1467 = vpow.pop %v1466
        %v1468 = vmul.f32 %v1400, 1.442695
        %v1469 = vpow.pop %v1468
        %v1470 = vmul.f32 %v1401, 1.442695
        %v1471 = vpow.pop %v1470
        %v1472 = vmul.f32 %v1402, 1.442695
        %v1473 = vpow.pop %v1472
        %v1474 = vmul.f32 %v1403, 1.442695
        %v1475 = vpow.pop %v1474
        %v1476 = vmul.f32 %v1404, 1.442695
        %v1477 = vpow.pop %v1476
        %v1478 = vmul.f32 %v1405, 1.442695
        %v1479 = vpow.pop %v1478
        %v1480 = vmul.f32 %v1406, 1.442695
        %v1481 = vpow.pop %v1480
        %v1482 = vmul.f32 %v1407, 1.442695
        %v1483 = vpow.pop %v1482
        %v1484 = vmul.f32 %v1408, 1.442695
        %v1485 = vpow.pop %v1484
        %v1486 = vmul.f32 %v1409, 1.442695
        %v1487 = vpow.pop %v1486
        %v1488 = vmul.f32 %v1410, 1.442695
        %v1489 = vpow.pop %v1488
        %v1490 = vmul.f32 %v1411, 1.442695
        %v1491 = vpow.pop %v1490
        %v1492 = vmul.f32 %v1412, 1.442695
        %v1493 = vpow.pop %v1492
        %v1494 = vmul.f32 %v1413, 1.442695
        %v1495 = vpow.pop %v1494
        %v1496 = vmul.f32 %v1414, 1.442695
        %v1497 = vpow.pop %v1496
        %v1498 = vmul.f32 %v1415, 1.442695
        %v1499 = vpow.pop %v1498
        %v1500 = vmul.f32 %v1416, 1.442695
        %v1501 = vpow.pop %v1500
        %v1502 = vmul.f32 %v1417, 1.442695
        %v1503 = vpow.pop %v1502
        %v1504 = vmul.f32 %v1418, 1.442695
        %v1505 = vpow.pop %v1504
        %v1506 = vmul.f32 %v1419, 1.442695
        %v1507 = vpow.pop %v1506
        %v1508 = vmul.f32 %v1420, 1.442695
        %v1509 = vpow.pop %v1508
        %v1510 = vmul.f32 %v1421, 1.442695
        %v1511 = vpow.pop %v1510
        %v1512 = vmul.f32 %v1422, 1.442695
        %v1513 = vpow.pop %v1512
        %v1514 = vmul.f32 %v1423, 1.442695
        %v1515 = vpow.pop %v1514
        %v1516 = vmul.f32 %v1424, 1.442695
        %v1517 = vpow.pop %v1516
        %v1518 = vmul.f32 %v1425, 1.442695
        %v1519 = vpow.pop %v1518
        %v1520 = vmul.f32 %v1426, 1.442695
        %v1521 = vpow.pop %v1520
        %v1522 = vmul.f32 %v1427, 1.442695
        %v1523 = vpow.pop %v1522
        %v1524 = vmul.f32 %v1428, 1.442695
        %v1525 = vpow.pop %v1524
        %v1526 = vmul.f32 %v1429, 1.442695
        %v1527 = vpow.pop %v1526
        %v1528 = vmul.f32 %v1430, 1.442695
        %v1529 = vpow.pop %v1528
        %v1530 = vmul.f32 %v1431, 1.442695
        %v1531 = vpow.pop %v1530
        %v1532 = vmul.f32 %v1432, 1.442695
        %v1533 = vpow.pop %v1532
        %v1534 = vmul.f32 %v1433, 1.442695
        %v1535 = vpow.pop %v1534
        %v1536 = vmul.f32 %v1434, 1.442695
        %v1537 = vpow.pop %v1536
        %v1538 = vmul.f32 %v1435, 1.442695
        %v1539 = vpow.pop %v1538
        %v1540 = vmul.f32 %v1436, 1.442695
        %v1541 = vpow.pop %v1540
        %v1542 = vmul.f32 %v1437, 1.442695
        %v1543 = vpow.pop %v1542
        %v1544 = vmul.f32 %v1438, 1.442695
        %v1545 = vpow.pop %v1544
        %v1546 = vmul.f32 %v1439, 1.442695
        %v1547 = vpow.pop %v1546
        %v1548 = vmul.f32 %v1440, 1.442695
        %v1549 = vpow.pop %v1548
        %v1550 = vmul.f32 %v1441, 1.442695
        %v1551 = vpow.pop %v1550
        %v1552 = vmul.f32 %v1442, 1.442695
        %v1553 = vpow.pop %v1552
        %v1554 = vmul.f32 %v1443, 1.442695
        %v1555 = vpow.pop %v1554
        %v1556 = vmul.f32 %v1444, 1.442695
        %v1557 = vpow.pop %v1556
        %v1558 = vmul.f32 %v1445, 1.442695
        %v1559 = vpow.pop %v1558
        %v1560 = vmul.f32 %v1446, 1.442695
        %v1561 = vpow.pop %v1560
        %v1562 = vmul.f32 %v1447, 1.442695
        %v1563 = vpow.pop %v1562
        %v1564 = vmul.f32 %v1448, 1.442695
        %v1565 = vpow.pop %v1564
        %v1566 = vmul.f32 %v1449, 1.442695
        %v1567 = vpow.pop %v1566
        %v1568 = vmul.f32 %v1450, 1.442695
        %v1569 = vpow.pop %v1568
        %v1570 = vmul.f32 %v1451, 1.442695
        %v1571 = vpow.pop %v1570
        %v1572 = vmul.f32 %v1452, 1.442695
        %v1573 = vpow.pop %v1572
        %v1574 = vmul.f32 %v1453, 1.442695
        %v1575 = vpow.pop %v1574
        %v1576 = vmul.f32 %v1454, 1.442695
        %v1577 = vpow.pop %v1576
        %v1578 = vmul.f32 %v1455, 1.442695
        %v1579 = vpow.pop %v1578
        %v1580 = vmul.f32 %v1456, 1.442695
        %v1581 = vpow.pop %v1580
        %v1582 = vmul.f32 %v1457, 1.442695
        %v1583 = vpow.pop %v1582
        %v1584 = vmul.f32 %v1458, 1.442695
        %v1585 = vpow.pop %v1584
        %v1586 = vmul.f32 %v1459, 1.442695
        %v1587 = vpow.pop %v1586
        %v1588 = vadd.f32 %v1461, %v1465
        %v1589 = vadd.f32 %v1588, %v1469
        %v1590 = vadd.f32 %v1589, %v1473
        %v1591 = vadd.f32 %v1590, %v1477
        %v1592 = vadd.f32 %v1591, %v1481
        %v1593 = vadd.f32 %v1592, %v1485
        %v1594 = vadd.f32 %v1593, %v1489
        %v1595 = vadd.f32 %v1594, %v1493
        %v1596 = vadd.f32 %v1595, %v1497
        %v1597 = vadd.f32 %v1596, %v1501
        %v1598 = vadd.f32 %v1597, %v1505
        %v1599 = vadd.f32 %v1598, %v1509
        %v1600 = vadd.f32 %v1599, %v1513
        %v1601 = vadd.f32 %v1600, %v1517
        %v1602 = vadd.f32 %v1601, %v1521
        %v1603 = vadd.f32 %v1602, %v1525
        %v1604 = vadd.f32 %v1603, %v1529
        %v1605 = vadd.f32 %v1604, %v1533
        %v1606 = vadd.f32 %v1605, %v1537
        %v1607 = vadd.f32 %v1606, %v1541
        %v1608 = vadd.f32 %v1607, %v1545
        %v1609 = vadd.f32 %v1608, %v1549
        %v1610 = vadd.f32 %v1609, %v1553
        %v1611 = vadd.f32 %v1610, %v1557
        %v1612 = vadd.f32 %v1611, %v1561
        %v1613 = vadd.f32 %v1612, %v1565
        %v1614 = vadd.f32 %v1613, %v1569
        %v1615 = vadd.f32 %v1614, %v1573
        %v1616 = vadd.f32 %v1615, %v1577
        %v1617 = vadd.f32 %v1616, %v1581
        %v1618 = vadd.f32 %v1617, %v1585
        %v1619 = vrot.slane %v1618, 4
        %v1620 = vadd.f32 %v1618, %v1619
        %v1621 = vrot.slane %v1620, 2
        %v1622 = vadd.f32 %v1620, %v1621
        %v1623 = vrot.slane %v1622, 1
        %v1624 = vadd.f32 %v1622, %v1623
        %v1625 = vadd.f32 %v1463, %v1467
        %v1626 = vadd.f32 %v1625, %v1471
        %v1627 = vadd.f32 %v1626, %v1475
        %v1628 = vadd.f32 %v1627, %v1479
        %v1629 = vadd.f32 %v1628, %v1483
        %v1630 = vadd.f32 %v1629, %v1487
        %v1631 = vadd.f32 %v1630, %v1491
        %v1632 = vadd.f32 %v1631, %v1495
        %v1633 = vadd.f32 %v1632, %v1499
        %v1634 = vadd.f32 %v1633, %v1503
        %v1635 = vadd.f32 %v1634, %v1507
        %v1636 = vadd.f32 %v1635, %v1511
        %v1637 = vadd.f32 %v1636, %v1515
        %v1638 = vadd.f32 %v1637, %v1519
        %v1639 = vadd.f32 %v1638, %v1523
        %v1640 = vadd.f32 %v1639, %v1527
        %v1641 = vadd.f32 %v1640, %v1531
        %v1642 = vadd.f32 %v1641, %v1535
        %v1643 = vadd.f32 %v1642, %v1539
        %v1644 = vadd.f32 %v1643, %v1543
        %v1645 = vadd.f32 %v1644, %v1547
        %v1646 = vadd.f32 %v1645, %v1551
        %v1647 = vadd.f32 %v1646, %v1555
        %v1648 = vadd.f32 %v1647, %v1559
        %v1649 = vadd.f32 %v1648, %v1563
        %v1650 = vadd.f32 %v1649, %v1567
        %v1651 = vadd.f32 %v1650, %v1571
        %v1652 = vadd.f32 %v1651, %v1575
        %v1653 = vadd.f32 %v1652, %v1579
        %v1654 = vadd.f32 %v1653, %v1583
        %v1655 = vadd.f32 %v1654, %v1587
        %v1656 = vrot.slane %v1655, 4
        %v1657 = vadd.f32 %v1655, %v1656
        %v1658 = vrot.slane %v1657, 2
        %v1659 = vadd.f32 %v1657, %v1658
        %v1660 = vrot.slane %v1659, 1
        %v1661 = vadd.f32 %v1659, %v1660
        %1662 = vmatprep.subr.mxu0 %v1523
        %1663 = vmatpush1.msra.mxu0 %v1521
        %1664 = vmatprep.subr.mxu0 %v1519
        %1665 = vmatpush1.msra.mxu0 %v1517
        %1666 = vmatprep.subr.mxu0 %v1515
        %1667 = vmatpush1.msra.mxu0 %v1513
        %1668 = vmatprep.subr.mxu0 %v1511
        %1669 = vmatpush1.msra.mxu0 %v1509
        %1670 = vmatprep.subr.mxu0 %v1507
        %1671 = vmatpush1.msra.mxu0 %v1505
        %1672 = vmatprep.subr.mxu0 %v1503
        %1673 = vmatpush1.msra.mxu0 %v1501
        %1674 = vmatprep.subr.mxu0 %v1499
        %1675 = vmatpush1.msra.mxu0 %v1497
        %1676 = vmatprep.subr.mxu0 %v1495
        %1677 = vmatpush1.msra.mxu0 %v1493
        %1678 = vmatprep.subr.mxu0 %v1491
        %1679 = vmatpush1.msra.mxu0 %v1489
        %1680 = vmatprep.subr.mxu0 %v1487
        %1681 = vmatpush1.msra.mxu0 %v1485
        %1682 = vmatprep.subr.mxu0 %v1483
        %1683 = vmatpush1.msra.mxu0 %v1481
        %1684 = vmatprep.subr.mxu0 %v1479
        %1685 = vmatpush1.msra.mxu0 %v1477
        %1686 = vmatprep.subr.mxu0 %v1475
        %1687 = vmatpush1.msra.mxu0 %v1473
        %1688 = vmatprep.subr.mxu0 %v1471
        %1689 = vmatpush1.msra.mxu0 %v1469
        %1690 = vmatprep.subr.mxu0 %v1467
        %1691 = vmatpush1.msra.mxu0 %v1465
        %1692 = vmatprep.subr.mxu0 %v1463
        %1693 = vmatpush1.msra.mxu0 %v1461
        %1694 = vmatprep.subr.mxu0 %v1587
        %1695 = vmatpush2.msra.mxu0 %v1585
        %1696 = vmatprep.subr.mxu0 %v1583
        %1697 = vmatpush2.msra.mxu0 %v1581
        %1698 = vmatprep.subr.mxu0 %v1579
        %1699 = vmatpush2.msra.mxu0 %v1577
        %1700 = vmatprep.subr.mxu0 %v1575
        %1701 = vmatpush2.msra.mxu0 %v1573
        %1702 = vmatprep.subr.mxu0 %v1571
        %1703 = vmatpush2.msra.mxu0 %v1569
        %1704 = vmatprep.subr.mxu0 %v1567
        %1705 = vmatpush2.msra.mxu0 %v1565
        %1706 = vmatprep.subr.mxu0 %v1563
        %1707 = vmatpush2.msra.mxu0 %v1561
        %1708 = vmatprep.subr.mxu0 %v1559
        %1709 = vmatpush2.msra.mxu0 %v1557
        %1710 = vmatprep.subr.mxu0 %v1555
        %1711 = vmatpush2.msra.mxu0 %v1553
        %1712 = vmatprep.subr.mxu0 %v1551
        %1713 = vmatpush2.msra.mxu0 %v1549
        %1714 = vmatprep.subr.mxu0 %v1547
        %1715 = vmatpush2.msra.mxu0 %v1545
        %1716 = vmatprep.subr.mxu0 %v1543
        %1717 = vmatpush2.msra.mxu0 %v1541
        %1718 = vmatprep.subr.mxu0 %v1539
        %1719 = vmatpush2.msra.mxu0 %v1537
        %1720 = vmatprep.subr.mxu0 %v1535
        %1721 = vmatpush2.msra.mxu0 %v1533
        %1722 = vmatprep.subr.mxu0 %v1531
        %1723 = vmatpush2.msra.mxu0 %v1529
        %1724 = vmatprep.subr.mxu0 %v1527
        %1725 = vmatpush2.msra.mxu0 %v1525
        %1726 = vmatprep.mubr.f32.mxu0 %v897
        %1727 = vmatmul.mubr.f32.gmra.mxu0 %v896
        %v1728 = vpop.f32.mrf.mxu0
        %v1729 = vadd.f32 0.0, %v1728
        %v1730 = vpop.f32.mrf.mxu0
        %v1731 = vadd.f32 0.0, %v1730
        %1732 = vmatprep.mubr.f32.mxu0 %v899
        %1733 = vmatmul.mubr.f32.gmra.mxu0 %v898
        %v1734 = vpop.f32.mrf.mxu0
        %v1735 = vadd.f32 0.0, %v1734
        %v1736 = vpop.f32.mrf.mxu0
        %v1737 = vadd.f32 0.0, %v1736
        %1738 = vmatprep.mubr.f32.mxu0 %v901
        %1739 = vmatmul.mubr.f32.gmra.mxu0 %v900
        %v1740 = vpop.f32.mrf.mxu0
        %v1741 = vadd.f32 0.0, %v1740
        %v1742 = vpop.f32.mrf.mxu0
        %v1743 = vadd.f32 0.0, %v1742
        %1744 = vmatprep.mubr.f32.mxu0 %v903
        %1745 = vmatmul.mubr.f32.gmra.mxu0 %v902
        %v1746 = vpop.f32.mrf.mxu0
        %v1747 = vadd.f32 0.0, %v1746
        %v1748 = vpop.f32.mrf.mxu0
        %v1749 = vadd.f32 0.0, %v1748
        %1750 = vdwg.mxu0
        %v1751 = vrcp.pop %v1624
        %v1752 = vrcp.pop %v1661
        %v1753 = vmul.f32 %v1729, %v1751
        %v1754 = vmul.f32 %v1731, %v1752
        %v1755 = vmul.f32 %v1735, %v1751
        %v1756 = vmul.f32 %v1737, %v1752
        %v1757 = vmul.f32 %v1741, %v1751
        %v1758 = vmul.f32 %v1743, %v1752
        %v1759 = vmul.f32 %v1747, %v1751
        %v1760 = vmul.f32 %v1749, %v1752
        %s1761 = smul.addr %s867, 8
        %s1762 = scalar_lea.vmem [#allocation3], %s1761
        %1763 = vst [vmem:[%s1762] sm:$0xff] %v1753
        %1764 = vst [vmem:[%s1762 + $0x8] sm:$0xff] %v1754
        %1765 = vst [vmem:[%s1762 + $0x10] sm:$0xff] %v1755
        %1766 = vst [vmem:[%s1762 + $0x18] sm:$0xff] %v1756
        %1767 = vst [vmem:[%s1762 + $0x20] sm:$0xff] %v1757
        %1768 = vst [vmem:[%s1762 + $0x28] sm:$0xff] %v1758
        %1769 = vst [vmem:[%s1762 + $0x30] sm:$0xff] %v1759
        %1770 = vst [vmem:[%s1762 + $0x38] sm:$0xff] %v1760
        %p1771 = scmp.eq.s32.totalorder %s23, 3
        // Predicated region
        $region41: #{tpu_custom_call.1} parent=35 // pred_check
          %p1772 = pneg %p1771
        $region42: #{tpu_custom_call.1} parent=35 // pred_check_branch
          %1774 = sbr.rel (%p1772) target = $region44
        $region43: #{tpu_custom_call.1} parent=35 // pred_region
          %v1775 = vld [vmem:[%s2] sm:$0xf]
          %v1776 = vld [vmem:[#allocation3] sm:$0xff]
          %v1777 = vld [vmem:[#allocation3 + $0x8] sm:$0xff]
          %v1778 = vld [vmem:[#allocation3 + $0x10] sm:$0xff]
          %v1779 = vld [vmem:[#allocation3 + $0x18] sm:$0xff]
          %v1780 = vld [vmem:[#allocation3 + $0x20] sm:$0xff]
          %v1781 = vld [vmem:[#allocation3 + $0x28] sm:$0xff]
          %v1782 = vld [vmem:[#allocation3 + $0x30] sm:$0xff]
          %v1783 = vld [vmem:[#allocation3 + $0x38] sm:$0xff]
          %v1784 = vld [vmem:[#allocation3 + $0x40] sm:$0xff]
          %v1785 = vld [vmem:[#allocation3 + $0x48] sm:$0xff]
          %v1786 = vld [vmem:[#allocation3 + $0x50] sm:$0xff]
          %v1787 = vld [vmem:[#allocation3 + $0x58] sm:$0xff]
          %v1788 = vld [vmem:[#allocation3 + $0x60] sm:$0xff]
          %v1789 = vld [vmem:[#allocation3 + $0x68] sm:$0xff]
          %v1790 = vld [vmem:[#allocation3 + $0x70] sm:$0xff]
          %v1791 = vld [vmem:[#allocation3 + $0x78] sm:$0xff]
          %v1792 = vld [vmem:[#allocation3 + $0x80] sm:$0xff]
          %v1793 = vld [vmem:[#allocation3 + $0x88] sm:$0xff]
          %v1794 = vld [vmem:[#allocation3 + $0x90] sm:$0xff]
          %v1795 = vld [vmem:[#allocation3 + $0x98] sm:$0xff]
          %v1796 = vld [vmem:[#allocation3 + $0xa0] sm:$0xff]
          %v1797 = vld [vmem:[#allocation3 + $0xa8] sm:$0xff]
          %v1798 = vld [vmem:[#allocation3 + $0xb0] sm:$0xff]
          %v1799 = vld [vmem:[#allocation3 + $0xb8] sm:$0xff]
          %v1800 = vld [vmem:[#allocation3 + $0xc0] sm:$0xff]
          %v1801 = vld [vmem:[#allocation3 + $0xc8] sm:$0xff]
          %v1802 = vld [vmem:[#allocation3 + $0xd0] sm:$0xff]
          %v1803 = vld [vmem:[#allocation3 + $0xd8] sm:$0xff]
          %v1804 = vld [vmem:[#allocation3 + $0xe0] sm:$0xff]
          %v1805 = vld [vmem:[#allocation3 + $0xe8] sm:$0xff]
          %v1806 = vld [vmem:[#allocation3 + $0xf0] sm:$0xff]
          %v1807 = vld [vmem:[#allocation3 + $0xf8] sm:$0xff]
          %v1808 = vld [vmem:[%s3] sm:$0xf]
          %1810 = vset.pattern.permute.xlu0 0
          %1811 = vperm.xlu0 %1810, %v1808
          %v1812 = vpop.permute.xlu0 %1811
          %1814 = vmatprep.subr.mxu0 %v1807
          %1815 = vmatpush1.msra.mxu0 %v1806
          %1816 = vmatprep.subr.mxu0 %v1805
          %1817 = vmatpush1.msra.mxu0 %v1804
          %1818 = vmatprep.subr.mxu0 %v1803
          %1819 = vmatpush1.msra.mxu0 %v1802
          %1820 = vmatprep.subr.mxu0 %v1801
          %1821 = vmatpush1.msra.mxu0 %v1800
          %1822 = vmatprep.subr.mxu0 %v1799
          %1823 = vmatpush1.msra.mxu0 %v1798
          %1824 = vmatprep.subr.mxu0 %v1797
          %1825 = vmatpush1.msra.mxu0 %v1796
          %1826 = vmatprep.subr.mxu0 %v1795
          %1827 = vmatpush1.msra.mxu0 %v1794
          %1828 = vmatprep.subr.mxu0 %v1793
          %1829 = vmatpush1.msra.mxu0 %v1792
          %1830 = vmatprep.subr.mxu0 %v1791
          %1831 = vmatpush1.msra.mxu0 %v1790
          %1832 = vmatprep.subr.mxu0 %v1789
          %1833 = vmatpush1.msra.mxu0 %v1788
          %1834 = vmatprep.subr.mxu0 %v1787
          %1835 = vmatpush1.msra.mxu0 %v1786
          %1836 = vmatprep.subr.mxu0 %v1785
          %1837 = vmatpush1.msra.mxu0 %v1784
          %1838 = vmatprep.subr.mxu0 %v1783
          %1839 = vmatpush1.msra.mxu0 %v1782
          %1840 = vmatprep.subr.mxu0 %v1781
          %1841 = vmatpush1.msra.mxu0 %v1780
          %1842 = vmatprep.subr.mxu0 %v1779
          %1843 = vmatpush1.msra.mxu0 %v1778
          %1844 = vmatprep.subr.mxu0 %v1777
          %1845 = vmatpush1.msra.mxu0 %v1776
          %1846 = vmatprep.subr.mxu0 0.0
          %1847 = vmatpush2.msra.mxu0 0.0
          %1848 = vmatprep.subr.mxu0 0.0
          %1849 = vmatpush2.msra.mxu0 0.0
          %1850 = vmatprep.subr.mxu0 0.0
          %1851 = vmatpush2.msra.mxu0 0.0
          %1852 = vmatprep.subr.mxu0 0.0
          %1853 = vmatpush2.msra.mxu0 0.0
          %1854 = vmatprep.subr.mxu0 0.0
          %1855 = vmatpush2.msra.mxu0 0.0
          %1856 = vmatprep.subr.mxu0 0.0
          %1857 = vmatpush2.msra.mxu0 0.0
          %1858 = vmatprep.subr.mxu0 0.0
          %1859 = vmatpush2.msra.mxu0 0.0
          %1860 = vmatprep.subr.mxu0 0.0
          %1861 = vmatpush2.msra.mxu0 0.0
          %1862 = vmatprep.subr.mxu0 0.0
          %1863 = vmatpush2.msra.mxu0 0.0
          %1864 = vmatprep.subr.mxu0 0.0
          %1865 = vmatpush2.msra.mxu0 0.0
          %1866 = vmatprep.subr.mxu0 0.0
          %1867 = vmatpush2.msra.mxu0 0.0
          %1868 = vmatprep.subr.mxu0 0.0
          %1869 = vmatpush2.msra.mxu0 0.0
          %1870 = vmatprep.subr.mxu0 0.0
          %1871 = vmatpush2.msra.mxu0 0.0
          %1872 = vmatprep.subr.mxu0 0.0
          %1873 = vmatpush2.msra.mxu0 0.0
          %1874 = vmatprep.subr.mxu0 0.0
          %1875 = vmatpush2.msra.mxu0 0.0
          %1876 = vmatprep.subr.mxu0 0.0
          %1877 = vmatpush2.msra.mxu0 0.0
          %1878 = vmatprep.mubr.f32.mxu0 0.0
          %1879 = vmatmul.mubr.f32.gmra.mxu0 %v1775
          %v1880 = vpop.f32.mrf.mxu0
          %v1881 = vadd.f32 %v1812, %v1880
          %v1882 = vpop.f32.mrf.mxu0
          %v1883 = vadd.f32 %v1812, %v1882
          %1884 = vdwg.mxu0
          %v1887 = vcombine.low %v1881, %v1883
          %1889 = vst [vmem:[%s202] sm:$0xff] %v1887
        $region44: #{tpu_custom_call.1} parent=35 // pred_fallthru
          _
        %s1890 = sand.u32 %s127, 1
        %s1891 = scalar_lea.sflag [#allocation5], %s1890
        %s1892 = sand.u32 %s127, 1
        %s1893 = smul.addr %s1892, 8
        %s1894 = scalar_lea.vmem [#allocation4], %s1893
        // Predicated region
        $region45: #{tpu_custom_call.1} parent=35 // pred_check
          %p1895 = pneg %p137
        $region46: #{tpu_custom_call.1} parent=35 // pred_check_branch
          %1897 = sbr.rel (%p1895) target = $region48
        $region47: #{tpu_custom_call.1} parent=35 // pred_region
          %s1899 = ssub.s32 128, 128
          %1900 = vsyncadd %s1891, %s1899
          %s1901 = smul.addr %s22, 2
          %s1902 = smul.addr %s1901, 64
          %s1903 = scalar_lea.hbm %s4, %s1902
          %s1905 = sshll.u32 %s1894, 4
          %s1906 = int_to_ptr.vmem [resolvable:$true] %s1905
          %1908 = dma.vmem_to_hbm [thread:$0]  %s1906, 128, %s1903, %s1891
        $region48: #{tpu_custom_call.1} parent=35 // pred_fallthru
          _
      $region36: #{tpu_custom_call.1} parent=5 // pred_fallthru
        _
      %p1909 = scmp.le.s32.totalorder 2, %s13
      // Predicated region
      $region49: #{tpu_custom_call.1} parent=5 // pred_check
        %p1910 = pneg %p1909
      $region50: #{tpu_custom_call.1} parent=5 // pred_check_branch
        %1912 = sbr.rel (%p1910) target = $region52
      $region51: #{tpu_custom_call.1} parent=5 // pred_region
        %s1913 = ssub.s32 %s13, 2
        // Predicated region
        $region53: #{tpu_custom_call.1} parent=51 // pred_check
          %p1914 = pneg %p143
        $region54: #{tpu_custom_call.1} parent=51 // pred_check_branch
          %1916 = sbr.rel (%p1914) target = $region56
        $region55: #{tpu_custom_call.1} parent=51 // pred_region
          %s1917 = sand.u32 %s128, 1
          %s1918 = scalar_lea.sflag [#allocation5], %s1917
          %s1919 = sand.u32 %s128, 1
          %s1920 = smul.addr %s1919, 8
          %s1921 = scalar_lea.vmem [#allocation4], %s1920
          %1922 = dma.done %s1918, 128
        $region56: #{tpu_custom_call.1} parent=51 // pred_fallthru
          _
      $region52: #{tpu_custom_call.1} parent=5 // pred_fallthru
        _
    $region6: #{tpu_custom_call.1} parent=1 // loop_footer
      %s17 = sadd.s32 1, %s13
    $region7: #{tpu_custom_call.1} parent=1 // loop_footer_branch
      %12 = sbr.rel target = $region3
    $region8: #{tpu_custom_call.1} parent=1 // loop_exit
      _
    %1923 = vsyncpa [#allocation5], 1
    %s1924 = scalar_lea.sflag [#allocation5], 1
    %1925 = vsyncpa %s1924, 1

</llo_original>
